<compile_context>
chip_gen: v7x
topology: tpu7x:2x2x1
jax: 0.10.0
libtpu: 0.0.40
codegen_flags: <defaults>
</compile_context>

<pallas_src>
import functools
import numpy as np

import jax
import jax.numpy as jnp
from jax import lax
from jax.experimental import pallas as pl
from jax.experimental.pallas import tpu as pltpu

PAD = 0
NEG_INF = -1e9
VMEM_LIMIT = 32 * 1024 * 1024   # explicit scoped-VMEM budget (v5e default is 16 MiB)


# ---------------------------------------------------------------------------
# In-kernel building blocks (operate on VMEM-resident values / refs)
# ---------------------------------------------------------------------------

def _layer_norm(z, gamma, beta, eps, denom):
    """torch-style LayerNorm: (z - mu) / (unbiased_std + eps) * g + b."""
    mu = jnp.mean(z, axis=-1, keepdims=True)
    d = z - mu
    var = jnp.sum(d * d, axis=-1, keepdims=True) / denom
    # exact divide here: the approx EUP reciprocal would scale the whole
    # residual stream at ~1e-3 relative error.
    return d / (jnp.sqrt(var) + eps) * gamma + beta


def _attention_block(x_q, x_kv, bias, wq_ref, wk_ref, wv_ref, wo_ref, bo_ref,
                     g_ref, b_ref, ctx_ref, n_head, d_k, scale, eps, denom):
    """MHA sub-layer: per-head attention -> single output projection ->
    residual + LayerNorm.  x_q/x_kv are f32 values; weights are bf16 refs,
    Q/K/V weights laid out [H, D, d_k] (head on the leading axis)."""
    bf = jnp.bfloat16
    xq_b = x_q.astype(bf)
    xkv_b = x_kv.astype(bf)

    # TODO(synk): for long sequences, replace the unrolled head loop with a
    # flash-style lax.fori_loop over Tk tiles using batched-head einsums
    # (online softmax) to bound the [Tq,Tk] score tile.
    for h in range(n_head):
        qh = jnp.dot(xq_b, wq_ref[h], preferred_element_type=jnp.float32)   # [Tq,dk]
        kh = jnp.dot(xkv_b, wk_ref[h], preferred_element_type=jnp.float32)  # [Tk,dk]
        vh = jnp.dot(xkv_b, wv_ref[h], preferred_element_type=jnp.float32)  # [Tk,dk]

        # contract last dims of both operands -> no transpose of K.
        s = lax.dot_general(qh.astype(bf), kh.astype(bf),
                            (((1,), (1,)), ((), ())),
                            preferred_element_type=jnp.float32) * scale
        s = s + bias                       # bias pre-broadcast to [Tq,Tk]
        s = s - jnp.max(s, axis=-1, keepdims=True)
        p = jnp.exp(s)
        p = p * pl.reciprocal(jnp.sum(p, axis=-1, keepdims=True), approx=True)

        # write this head's context into its lane slice of the ctx slab.
        ctx_ref[:, h * d_k:(h + 1) * d_k] = jnp.dot(
            p.astype(bf), vh.astype(bf), preferred_element_type=jnp.float32)

    # single full-K output projection: [Tq,D] x [D,D]
    out = jnp.dot(ctx_ref[...].astype(bf), wo_ref[...],
                  preferred_element_type=jnp.float32) + bo_ref[...]

    # residual + LayerNorm.  TODO(synk): dropout skipped (eval-mode forward).
    return _layer_norm(out + x_q, g_ref[...], b_ref[...], eps, denom)


def _ffn_block(x, w1_ref, b1_ref, w2_ref, b2_ref, g_ref, b_ref, eps, denom):
    """Position-wise FFN + residual + LayerNorm."""
    bf = jnp.bfloat16
    h = jnp.dot(x.astype(bf), w1_ref[...],
                preferred_element_type=jnp.float32) + b1_ref[...]
    h = jnp.maximum(h, 0.0)
    y = jnp.dot(h.astype(bf), w2_ref[...],
                preferred_element_type=jnp.float32) + b2_ref[...]
    return _layer_norm(y + x, g_ref[...], b_ref[...], eps, denom)


# ---------------------------------------------------------------------------
# Fused layer kernels
# ---------------------------------------------------------------------------

def _encoder_layer_kernel(x_ref, kb_ref,
                          wq_ref, wk_ref, wv_ref, wo_ref, bo_ref, g1_ref, b1_ref,
                          w1_ref, fb1_ref, w2_ref, fb2_ref, g2_ref, b2_ref,
                          o_ref, ctx_ref, *, n_head, d_k, scale, eps, denom):
    x = x_ref[0]                                    # [Ts, D] f32
    T = x.shape[0]
    # hoisted single materialization of the key-padding bias.
    bias = jnp.broadcast_to(kb_ref[0], (T, T))      # [Ts, Ts]
    a = _attention_block(x, x, bias, wq_ref, wk_ref, wv_ref, wo_ref, bo_ref,
                         g1_ref, b1_ref, ctx_ref, n_head, d_k, scale, eps, denom)
    o_ref[0] = _ffn_block(a, w1_ref, fb1_ref, w2_ref, fb2_ref, g2_ref, b2_ref,
                          eps, denom)


def _decoder_layer_kernel(y_ref, enc_ref, tb_ref, sb_ref,
                          s_wq, s_wk, s_wv, s_wo, s_bo, s_g, s_b,
                          c_wq, c_wk, c_wv, c_wo, c_bo, c_g, c_b,
                          w1_ref, fb1_ref, w2_ref, fb2_ref, g2_ref, b2_ref,
                          o_ref, ctx_ref, *, n_head, d_k, scale, eps, denom):
    y = y_ref[0]                                    # [Tt, D]
    enc = enc_ref[0]                                # [Ts, D]
    Tt = y.shape[0]
    Ts = enc.shape[0]

    # self-attention: key-padding bias + in-kernel causal mask.
    row = lax.broadcasted_iota(jnp.int32, (Tt, Tt), 0)
    col = lax.broadcasted_iota(jnp.int32, (Tt, Tt), 1)
    slf_bias = (jnp.broadcast_to(tb_ref[0], (Tt, Tt))
                + jnp.where(col > row, NEG_INF, 0.0))
    y1 = _attention_block(y, y, slf_bias, s_wq, s_wk, s_wv, s_wo, s_bo, s_g, s_b,
                          ctx_ref, n_head, d_k, scale, eps, denom)

    # cross-attention over encoder output: src key-padding bias only.
    cross_bias = jnp.broadcast_to(sb_ref[0], (Tt, Ts))
    y2 = _attention_block(y1, enc, cross_bias, c_wq, c_wk, c_wv, c_wo, c_bo,
                          c_g, c_b, ctx_ref, n_head, d_k, scale, eps, denom)

    o_ref[0] = _ffn_block(y2, w1_ref, fb1_ref, w2_ref, fb2_ref, g2_ref, b2_ref,
                          eps, denom)


def _linear_logsoftmax_kernel(x_ref, w_ref, o_ref):
    logits = jnp.dot(x_ref[...], w_ref[...], preferred_element_type=jnp.float32)
    m = jnp.max(logits, axis=-1, keepdims=True)
    s = logits - m
    lse = jnp.log(jnp.sum(jnp.exp(s), axis=-1, keepdims=True))
    o_ref[...] = s - lse


# ---------------------------------------------------------------------------
# Pallas wrappers
# ---------------------------------------------------------------------------

def _const_spec(arr):
    nd = arr.ndim
    return pl.BlockSpec(arr.shape, lambda b, _nd=nd: (0,) * _nd)


def _cast_attn(p):
    bf = jnp.bfloat16
    return [p["wq"].astype(bf), p["wk"].astype(bf), p["wv"].astype(bf),
            p["wo"].astype(bf), p["bo"], p["ln_g"], p["ln_b"]]


def _cast_ffn(p):
    bf = jnp.bfloat16
    return [p["w1"].astype(bf), p["b1"], p["w2"].astype(bf), p["b2"],
            p["ln_g"], p["ln_b"]]


def encoder_layer(x, src_key_bias, slf_p, ffn_p, n_head, *, eps=1e-3):
    """x: [B, Ts, D] f32; src_key_bias: [B, 1, Ts] additive bias."""
    B, T, D = x.shape
    d_k = D // n_head
    kern = functools.partial(_encoder_layer_kernel, n_head=n_head, d_k=d_k,
                             scale=1.0 / float(np.sqrt(d_k)), eps=eps,
                             denom=float(D - 1))
    weights = _cast_attn(slf_p) + _cast_ffn(ffn_p)
    in_specs = ([pl.BlockSpec((1, T, D), lambda b: (b, 0, 0)),
                 pl.BlockSpec((1, 1, T), lambda b: (b, 0, 0))]
                + [_const_spec(w) for w in weights])
    # TODO(synk): for large T / D on v7x (64 MiB VMEM), also tile Tq
    # ("parallel") with K/V and weights resident at constant block index.
    return pl.pallas_call(
        kern,
        grid=(B,),
        in_specs=in_specs,
        out_specs=pl.BlockSpec((1, T, D), lambda b: (b, 0, 0)),
        out_shape=jax.ShapeDtypeStruct((B, T, D), jnp.float32),
        scratch_shapes=[pltpu.VMEM((T, D), jnp.float32)],
        compiler_params=pltpu.CompilerParams(
            dimension_semantics=("parallel",),
            vmem_limit_bytes=VMEM_LIMIT),
    )(x, src_key_bias, *weights)


def decoder_layer(y, enc_out, tgt_key_bias, src_key_bias, slf_p, enc_p, ffn_p,
                  n_head, *, eps=1e-3):
    """y: [B, Tt, D]; enc_out: [B, Ts, D]; biases: [B, 1, T*] additive."""
    B, Tt, D = y.shape
    Ts = enc_out.shape[1]
    d_k = D // n_head
    kern = functools.partial(_decoder_layer_kernel, n_head=n_head, d_k=d_k,
                             scale=1.0 / float(np.sqrt(d_k)), eps=eps,
                             denom=float(D - 1))
    weights = _cast_attn(slf_p) + _cast_attn(enc_p) + _cast_ffn(ffn_p)
    in_specs = ([pl.BlockSpec((1, Tt, D), lambda b: (b, 0, 0)),
                 pl.BlockSpec((1, Ts, D), lambda b: (b, 0, 0)),
                 pl.BlockSpec((1, 1, Tt), lambda b: (b, 0, 0)),
                 pl.BlockSpec((1, 1, Ts), lambda b: (b, 0, 0))]
                + [_const_spec(w) for w in weights])
    return pl.pallas_call(
        kern,
        grid=(B,),
        in_specs=in_specs,
        out_specs=pl.BlockSpec((1, Tt, D), lambda b: (b, 0, 0)),
        out_shape=jax.ShapeDtypeStruct((B, Tt, D), jnp.float32),
        scratch_shapes=[pltpu.VMEM((Tt, D), jnp.float32)],
        compiler_params=pltpu.CompilerParams(
            dimension_semantics=("parallel",),
            vmem_limit_bytes=VMEM_LIMIT),
    )(y, enc_out, tgt_key_bias, src_key_bias, *weights)


def pallas_linear_logsoftmax(x, w):
    """x: [M, D] f32; w: [D, V] f32. Returns log_softmax(x @ w) as [M, V] f32."""
    M, D = x.shape
    V = w.shape[1]
    # Tile M so DMA pipelines under the MXU and both TCs get work; weights
    # stay resident via a constant index map.
    tm = M if M <= 256 else 256
    grid = (pl.cdiv(M, tm),)
    # TODO(synk): for vocabularies >= 32K, also tile V with an online
    # logsumexp so the [tm, V] logits block fits v7x's 64 MiB VMEM.
    return pl.pallas_call(
        _linear_logsoftmax_kernel,
        grid=grid,
        in_specs=[pl.BlockSpec((tm, D), lambda i: (i, 0)),
                  pl.BlockSpec((D, V), lambda i: (0, 0))],
        out_specs=pl.BlockSpec((tm, V), lambda i: (i, 0)),
        out_shape=jax.ShapeDtypeStruct((M, V), jnp.float32),
        compiler_params=pltpu.CompilerParams(
            dimension_semantics=("parallel",),
            vmem_limit_bytes=VMEM_LIMIT),
    )(x.astype(jnp.bfloat16), w.astype(jnp.bfloat16))


# ---------------------------------------------------------------------------
# Model glue (plain JAX: embedding gathers, bias construction)
# ---------------------------------------------------------------------------

def transformer_forward(params, cfg, src, src_pos, tgt, tgt_pos):
    # Transformer.forward
    tgt = tgt[:, :-1]
    tgt_pos = tgt_pos[:, :-1]
    B, Ts = src.shape
    Tt = tgt.shape[1]
    D = cfg["d_model"]
    H = cfg["n_head"]

    # Additive key-padding biases, [B, 1, Tk] (no full [B,Tq,Tk] mask in HBM).
    src_key_bias = jnp.where(src == PAD, NEG_INF, 0.0)[:, None, :].astype(jnp.float32)
    tgt_key_bias = jnp.where(tgt == PAD, NEG_INF, 0.0)[:, None, :].astype(jnp.float32)

    # ----- Encoder -----
    # TODO(synk): embedding gathers stay in plain JAX (no clean Pallas win here).
    x = params["enc_ebd"][src] + params["pos_ebd"][src_pos]
    enc_outputs = []
    for lp in params["enc_layers"]:
        x = encoder_layer(x, src_key_bias, lp["slf"], lp["ffn"], H)
        enc_outputs.append(x)

    # ----- Decoder ----- (layer i consumes encoder layer i's output, as in ref)
    y = params["dec_ebd"][tgt] + params["pos_ebd"][tgt_pos]
    for lp, enc_out in zip(params["dec_layers"], enc_outputs):
        y = decoder_layer(y, enc_out, tgt_key_bias, src_key_bias,
                          lp["slf"], lp["enc"], lp["ffn"], H)

    # final linear (bias=False) + log_softmax over vocab, flattened to [-1, V]
    return pallas_linear_logsoftmax(y.reshape(-1, D), params["w_out"])


# ---------------------------------------------------------------------------
# Deterministic parameter initialization
# ---------------------------------------------------------------------------

def sinusoid_position_table(n_position, d_model):
    pos = np.arange(n_position)[:, None].astype(np.float64)
    j = np.arange(d_model)[None, :].astype(np.float64)
    angle = pos / np.power(10000.0, 2 * (j // 2) / d_model)
    enc = angle.copy()
    enc[1:, 0::2] = np.sin(angle[1:, 0::2])
    enc[1:, 1::2] = np.cos(angle[1:, 1::2])
    enc[0, :] = 0.0                      # padding_idx row
    return jnp.asarray(enc, jnp.float32)


def xavier_normal(key, shape):
    std = float(np.sqrt(2.0 / (shape[0] + shape[1])))
    return std * jax.random.normal(key, shape, jnp.float32)


def init_mha_params(key, d_model, n_head):
    dk = d_model // n_head
    ks = jax.random.split(key, 4)

    def head_weight(k):
        # Q/K/V projection stored head-major [H, D, dk] so the kernel indexes
        # heads on the leading axis (no lane slicing of activations).
        w = xavier_normal(k, (d_model, n_head * dk))
        return jnp.transpose(w.reshape(d_model, n_head, dk), (1, 0, 2))

    return dict(
        wq=head_weight(ks[0]),
        wk=head_weight(ks[1]),
        wv=head_weight(ks[2]),
        wo=xavier_normal(ks[3], (n_head * dk, d_model)),
        bo=jnp.zeros((1, d_model), jnp.float32),
        ln_g=jnp.ones((1, d_model), jnp.float32),
        ln_b=jnp.zeros((1, d_model), jnp.float32),
    )


def init_ffn_params(key, d_model, d_ff):
    ks = jax.random.split(key, 2)
    return dict(
        w1=xavier_normal(ks[0], (d_model, d_ff)),
        b1=jnp.zeros((1, d_ff), jnp.float32),
        w2=xavier_normal(ks[1], (d_ff, d_model)),
        b2=jnp.zeros((1, d_model), jnp.float32),
        ln_g=jnp.ones((1, d_model), jnp.float32),
        ln_b=jnp.zeros((1, d_model), jnp.float32),
    )


def init_params(key, cfg):
    D = cfg["d_model"]
    n_position = cfg["max_word_len"] + 1
    keys = jax.random.split(key, 8)

    enc_ebd = jax.random.uniform(keys[0], (cfg["enc_vocab_size"], D),
                                 jnp.float32, -0.1, 0.1)
    dec_ebd = jax.random.uniform(keys[1], (cfg["dec_vocab_size"], D),
                                 jnp.float32, -0.1, 0.1)
    pos_ebd = sinusoid_position_table(n_position, D)

    enc_layers, dec_layers = [], []
    lkeys = jax.random.split(keys[2], cfg["n_stack_layers"] * 5)
    idx = 0
    for _ in range(cfg["n_stack_layers"]):
        enc_layers.append(dict(
            slf=init_mha_params(lkeys[idx + 0], D, cfg["n_head"]),
            ffn=init_ffn_params(lkeys[idx + 1], D, cfg["d_ff"]),
        ))
        dec_layers.append(dict(
            slf=init_mha_params(lkeys[idx + 2], D, cfg["n_head"]),
            enc=init_mha_params(lkeys[idx + 3], D, cfg["n_head"]),
            ffn=init_ffn_params(lkeys[idx + 4], D, cfg["d_ff"]),
        ))
        idx += 5

    if cfg["share_linear"]:
        w_out = dec_ebd.T                                   # weight tying
    else:
        w_out = xavier_normal(keys[3], (cfg["dec_vocab_size"], D)).T  # [D, V]

    return dict(enc_ebd=enc_ebd, dec_ebd=dec_ebd, pos_ebd=pos_ebd,
                enc_layers=enc_layers, dec_layers=dec_layers, w_out=w_out)


# ---------------------------------------------------------------------------
# main
# ---------------------------------------------------------------------------

if __name__ == "__main__":
    cfg = dict(
        enc_vocab_size=20,
        dec_vocab_size=20,
        max_word_len=8,        # -> n_position = 9
        n_stack_layers=2,
        d_model=32,
        d_ff=64,
        n_head=4,
        dropout=0.1,           # identity (eval mode)
        share_linear=False,
    )

    root = jax.random.PRNGKey(0)
    pkey, dkey = jax.random.split(root)
    params = init_params(pkey, cfg)

    B, Ts, Tt = 2, 8, 8
    k1, k2 = jax.random.split(dkey)
    src = jax.random.randint(k1, (B, Ts), 1, cfg["enc_vocab_size"], jnp.int32)
    tgt = jax.random.randint(k2, (B, Tt), 1, cfg["dec_vocab_size"], jnp.int32)

    # introduce padding at the tail of one source sequence to exercise masks
    src = src.at[1, 6:].set(PAD)
    src_pos = jnp.where(src == PAD, 0,
                        jnp.broadcast_to(jnp.arange(1, Ts + 1, dtype=jnp.int32),
                                         (B, Ts)))
    tgt_pos = jnp.broadcast_to(jnp.arange(1, Tt + 1, dtype=jnp.int32), (B, Tt))

    out = transformer_forward(params, cfg, src, src_pos, tgt, tgt_pos)
    out = jax.block_until_ready(out)

    expected_shape = (B * (Tt - 1), cfg["dec_vocab_size"])
    assert out.shape == expected_shape, (out.shape, expected_shape)
    assert bool(jnp.all(jnp.isfinite(out)))
    # rows of log_softmax must exponentiate-sum to 1
    assert bool(jnp.allclose(jnp.sum(jnp.exp(out), axis=-1), 1.0, atol=1e-4))

    print("KERNEL_OK")
</pallas_src>

<mosaic_0001>
module attributes {stable_mosaic.version = 11 : i64} {
  func.func @_encoder_layer_kernel(%arg0: i32, %arg1: memref<1x8x32xf32, #tpu.memory_space<vmem>>, %arg2: memref<1x1x8xf32, #tpu.memory_space<vmem>>, %arg3: memref<4x32x8xbf16, #tpu.memory_space<vmem>>, %arg4: memref<4x32x8xbf16, #tpu.memory_space<vmem>>, %arg5: memref<4x32x8xbf16, #tpu.memory_space<vmem>>, %arg6: memref<32x32xbf16, #tpu.memory_space<vmem>>, %arg7: memref<1x32xf32, #tpu.memory_space<vmem>>, %arg8: memref<1x32xf32, #tpu.memory_space<vmem>>, %arg9: memref<1x32xf32, #tpu.memory_space<vmem>>, %arg10: memref<32x64xbf16, #tpu.memory_space<vmem>>, %arg11: memref<1x64xf32, #tpu.memory_space<vmem>>, %arg12: memref<64x32xbf16, #tpu.memory_space<vmem>>, %arg13: memref<1x32xf32, #tpu.memory_space<vmem>>, %arg14: memref<1x32xf32, #tpu.memory_space<vmem>>, %arg15: memref<1x32xf32, #tpu.memory_space<vmem>>, %arg16: memref<1x8x32xf32, #tpu.memory_space<vmem>>, %arg17: memref<8x32xf32, #tpu.memory_space<vmem>>) attributes {dimension_semantics = [#tpu.dimension_semantics<parallel>], iteration_bounds = array<i64: 2>, scalar_prefetch = 0 : i64, scratch_operands = 1 : i64, tpu.core_type = #tpu.core_type<tc>, window_params = [{transform_indices = @transform_0, window_bounds = array<i64: 1, 8, 32>}, {transform_indices = @transform_1, window_bounds = array<i64: 1, 1, 8>}, {pipeline_mode = #tpu.pipeline_mode<synchronous>, transform_indices = @transform_2, window_bounds = array<i64: 4, 32, 8>}, {pipeline_mode = #tpu.pipeline_mode<synchronous>, transform_indices = @transform_3, window_bounds = array<i64: 4, 32, 8>}, {pipeline_mode = #tpu.pipeline_mode<synchronous>, transform_indices = @transform_4, window_bounds = array<i64: 4, 32, 8>}, {pipeline_mode = #tpu.pipeline_mode<synchronous>, transform_indices = @transform_5, window_bounds = array<i64: 32, 32>}, {pipeline_mode = #tpu.pipeline_mode<synchronous>, transform_indices = @transform_6, window_bounds = array<i64: 1, 32>}, {pipeline_mode = #tpu.pipeline_mode<synchronous>, transform_indices = @transform_7, window_bounds = array<i64: 1, 32>}, {pipeline_mode = #tpu.pipeline_mode<synchronous>, transform_indices = @transform_8, window_bounds = array<i64: 1, 32>}, {pipeline_mode = #tpu.pipeline_mode<synchronous>, transform_indices = @transform_9, window_bounds = array<i64: 32, 64>}, {pipeline_mode = #tpu.pipeline_mode<synchronous>, transform_indices = @transform_10, window_bounds = array<i64: 1, 64>}, {pipeline_mode = #tpu.pipeline_mode<synchronous>, transform_indices = @transform_11, window_bounds = array<i64: 64, 32>}, {pipeline_mode = #tpu.pipeline_mode<synchronous>, transform_indices = @transform_12, window_bounds = array<i64: 1, 32>}, {pipeline_mode = #tpu.pipeline_mode<synchronous>, transform_indices = @transform_13, window_bounds = array<i64: 1, 32>}, {pipeline_mode = #tpu.pipeline_mode<synchronous>, transform_indices = @transform_14, window_bounds = array<i64: 1, 32>}, {transform_indices = @transform_15, window_bounds = array<i64: 1, 8, 32>}]} {
    %c0 = arith.constant 0 : index
    %c0_0 = arith.constant 0 : index
    %c0_1 = arith.constant 0 : index
    %0 = vector.load %arg1[%c0, %c0_0, %c0_1] : memref<1x8x32xf32, #tpu.memory_space<vmem>>, vector<1x8x32xf32>
    %1 = vector.shape_cast %0 : vector<1x8x32xf32> to vector<8x32xf32>
    %c0_2 = arith.constant 0 : index
    %c0_3 = arith.constant 0 : index
    %c0_4 = arith.constant 0 : index
    %2 = vector.load %arg2[%c0_2, %c0_3, %c0_4] : memref<1x1x8xf32, #tpu.memory_space<vmem>>, vector<1x1x8xf32>
    %3 = vector.shape_cast %2 : vector<1x1x8xf32> to vector<1x8xf32>
    %4 = vector.shape_cast %3 : vector<1x8xf32> to vector<1x8xf32>
    %5 = vector.broadcast %4 : vector<1x8xf32> to vector<8x8xf32>
    %6 = arith.truncf %1 : vector<8x32xf32> to vector<8x32xbf16>
    %7 = arith.truncf %1 : vector<8x32xf32> to vector<8x32xbf16>
    %c0_5 = arith.constant 0 : index
    %c0_6 = arith.constant 0 : index
    %c0_7 = arith.constant 0 : index
    %8 = vector.load %arg3[%c0_5, %c0_6, %c0_7] : memref<4x32x8xbf16, #tpu.memory_space<vmem>>, vector<1x32x8xbf16>
    %9 = vector.shape_cast %8 : vector<1x32x8xbf16> to vector<32x8xbf16>
    %cst = arith.constant dense<0.000000e+00> : vector<8x8xf32>
    %10 = tpu.matmul %6, %9, %cst {dimension_numbers = #tpu.dot_dimension_numbers<[1], [0], [0], [1], [0, 0, 1, 1], [], []>} : vector<8x32xbf16>, vector<32x8xbf16>, vector<8x8xf32> -> vector<8x8xf32>
    %c0_8 = arith.constant 0 : index
    %c0_9 = arith.constant 0 : index
    %c0_10 = arith.constant 0 : index
    %11 = vector.load %arg4[%c0_8, %c0_9, %c0_10] : memref<4x32x8xbf16, #tpu.memory_space<vmem>>, vector<1x32x8xbf16>
    %12 = vector.shape_cast %11 : vector<1x32x8xbf16> to vector<32x8xbf16>
    %cst_11 = arith.constant dense<0.000000e+00> : vector<8x8xf32>
    %13 = tpu.matmul %7, %12, %cst_11 {dimension_numbers = #tpu.dot_dimension_numbers<[1], [0], [0], [1], [0, 0, 1, 1], [], []>} : vector<8x32xbf16>, vector<32x8xbf16>, vector<8x8xf32> -> vector<8x8xf32>
    %c0_12 = arith.constant 0 : index
    %c0_13 = arith.constant 0 : index
    %c0_14 = arith.constant 0 : index
    %14 = vector.load %arg5[%c0_12, %c0_13, %c0_14] : memref<4x32x8xbf16, #tpu.memory_space<vmem>>, vector<1x32x8xbf16>
    %15 = vector.shape_cast %14 : vector<1x32x8xbf16> to vector<32x8xbf16>
    %cst_15 = arith.constant dense<0.000000e+00> : vector<8x8xf32>
    %16 = tpu.matmul %7, %15, %cst_15 {dimension_numbers = #tpu.dot_dimension_numbers<[1], [0], [0], [1], [0, 0, 1, 1], [], []>} : vector<8x32xbf16>, vector<32x8xbf16>, vector<8x8xf32> -> vector<8x8xf32>
    %17 = arith.truncf %10 : vector<8x8xf32> to vector<8x8xbf16>
    %18 = arith.truncf %13 : vector<8x8xf32> to vector<8x8xbf16>
    %cst_16 = arith.constant dense<0.000000e+00> : vector<8x8xf32>
    %19 = tpu.matmul %17, %18, %cst_16 {dimension_numbers = #tpu.dot_dimension_numbers<[1], [1], [0], [0], [0, 0, 1, 0], [], []>} : vector<8x8xbf16>, vector<8x8xbf16>, vector<8x8xf32> -> vector<8x8xf32>
    %cst_17 = arith.constant 0.353553385 : f32
    %20 = vector.broadcast %cst_17 : f32 to vector<8x8xf32>
    %21 = arith.mulf %19, %20 : vector<8x8xf32>
    %22 = arith.addf %21, %5 : vector<8x8xf32>
    %cst_18 = arith.constant dense<0xFF800000> : vector<8xf32>
    %23 = vector.multi_reduction <maximumf>, %22, %cst_18 [1] : vector<8x8xf32> to vector<8xf32>
    %24 = vector.shape_cast %23 : vector<8xf32> to vector<8x1xf32>
    %25 = vector.broadcast %24 : vector<8x1xf32> to vector<8x8xf32>
    %26 = arith.subf %22, %25 : vector<8x8xf32>
    %27 = math.exp %26 : vector<8x8xf32>
    %cst_19 = arith.constant dense<0.000000e+00> : vector<8xf32>
    %28 = vector.multi_reduction <add>, %27, %cst_19 [1] : vector<8x8xf32> to vector<8xf32>
    %29 = vector.shape_cast %28 : vector<8xf32> to vector<8x1xf32>
    %30 = tpu.reciprocal %29 {approx = true} : vector<8x1xf32> -> vector<8x1xf32>
    %31 = vector.broadcast %30 : vector<8x1xf32> to vector<8x8xf32>
    %32 = arith.mulf %27, %31 : vector<8x8xf32>
    %33 = arith.truncf %32 : vector<8x8xf32> to vector<8x8xbf16>
    %34 = arith.truncf %16 : vector<8x8xf32> to vector<8x8xbf16>
    %cst_20 = arith.constant dense<0.000000e+00> : vector<8x8xf32>
    %35 = tpu.matmul %33, %34, %cst_20 {dimension_numbers = #tpu.dot_dimension_numbers<[1], [0], [0], [1], [0, 0, 1, 1], [], []>} : vector<8x8xbf16>, vector<8x8xbf16>, vector<8x8xf32> -> vector<8x8xf32>
    %c0_21 = arith.constant 0 : index
    %c0_22 = arith.constant 0 : index
    %36 = vector.load %arg17[%c0_21, %c0_22] : memref<8x32xf32, #tpu.memory_space<vmem>>, vector<8x8xf32>
    tpu.vector_store %arg17[%c0_21, %c0_22], %35 {strides = array<i32>} : memref<8x32xf32, #tpu.memory_space<vmem>>, vector<8x8xf32>,
    %c1 = arith.constant 1 : index
    %c0_23 = arith.constant 0 : index
    %c0_24 = arith.constant 0 : index
    %37 = vector.load %arg3[%c1, %c0_23, %c0_24] : memref<4x32x8xbf16, #tpu.memory_space<vmem>>, vector<1x32x8xbf16>
    %38 = vector.shape_cast %37 : vector<1x32x8xbf16> to vector<32x8xbf16>
    %cst_25 = arith.constant dense<0.000000e+00> : vector<8x8xf32>
    %39 = tpu.matmul %6, %38, %cst_25 {dimension_numbers = #tpu.dot_dimension_numbers<[1], [0], [0], [1], [0, 0, 1, 1], [], []>} : vector<8x32xbf16>, vector<32x8xbf16>, vector<8x8xf32> -> vector<8x8xf32>
    %c1_26 = arith.constant 1 : index
    %c0_27 = arith.constant 0 : index
    %c0_28 = arith.constant 0 : index
    %40 = vector.load %arg4[%c1_26, %c0_27, %c0_28] : memref<4x32x8xbf16, #tpu.memory_space<vmem>>, vector<1x32x8xbf16>
    %41 = vector.shape_cast %40 : vector<1x32x8xbf16> to vector<32x8xbf16>
    %cst_29 = arith.constant dense<0.000000e+00> : vector<8x8xf32>
    %42 = tpu.matmul %7, %41, %cst_29 {dimension_numbers = #tpu.dot_dimension_numbers<[1], [0], [0], [1], [0, 0, 1, 1], [], []>} : vector<8x32xbf16>, vector<32x8xbf16>, vector<8x8xf32> -> vector<8x8xf32>
    %c1_30 = arith.constant 1 : index
    %c0_31 = arith.constant 0 : index
    %c0_32 = arith.constant 0 : index
    %43 = vector.load %arg5[%c1_30, %c0_31, %c0_32] : memref<4x32x8xbf16, #tpu.memory_space<vmem>>, vector<1x32x8xbf16>
    %44 = vector.shape_cast %43 : vector<1x32x8xbf16> to vector<32x8xbf16>
    %cst_33 = arith.constant dense<0.000000e+00> : vector<8x8xf32>
    %45 = tpu.matmul %7, %44, %cst_33 {dimension_numbers = #tpu.dot_dimension_numbers<[1], [0], [0], [1], [0, 0, 1, 1], [], []>} : vector<8x32xbf16>, vector<32x8xbf16>, vector<8x8xf32> -> vector<8x8xf32>
    %46 = arith.truncf %39 : vector<8x8xf32> to vector<8x8xbf16>
    %47 = arith.truncf %42 : vector<8x8xf32> to vector<8x8xbf16>
    %cst_34 = arith.constant dense<0.000000e+00> : vector<8x8xf32>
    %48 = tpu.matmul %46, %47, %cst_34 {dimension_numbers = #tpu.dot_dimension_numbers<[1], [1], [0], [0], [0, 0, 1, 0], [], []>} : vector<8x8xbf16>, vector<8x8xbf16>, vector<8x8xf32> -> vector<8x8xf32>
    %cst_35 = arith.constant 0.353553385 : f32
    %49 = vector.broadcast %cst_35 : f32 to vector<8x8xf32>
    %50 = arith.mulf %48, %49 : vector<8x8xf32>
    %51 = arith.addf %50, %5 : vector<8x8xf32>
    %cst_36 = arith.constant dense<0xFF800000> : vector<8xf32>
    %52 = vector.multi_reduction <maximumf>, %51, %cst_36 [1] : vector<8x8xf32> to vector<8xf32>
    %53 = vector.shape_cast %52 : vector<8xf32> to vector<8x1xf32>
    %54 = vector.broadcast %53 : vector<8x1xf32> to vector<8x8xf32>
    %55 = arith.subf %51, %54 : vector<8x8xf32>
    %56 = math.exp %55 : vector<8x8xf32>
    %cst_37 = arith.constant dense<0.000000e+00> : vector<8xf32>
    %57 = vector.multi_reduction <add>, %56, %cst_37 [1] : vector<8x8xf32> to vector<8xf32>
    %58 = vector.shape_cast %57 : vector<8xf32> to vector<8x1xf32>
    %59 = tpu.reciprocal %58 {approx = true} : vector<8x1xf32> -> vector<8x1xf32>
    %60 = vector.broadcast %59 : vector<8x1xf32> to vector<8x8xf32>
    %61 = arith.mulf %56, %60 : vector<8x8xf32>
    %62 = arith.truncf %61 : vector<8x8xf32> to vector<8x8xbf16>
    %63 = arith.truncf %45 : vector<8x8xf32> to vector<8x8xbf16>
    %cst_38 = arith.constant dense<0.000000e+00> : vector<8x8xf32>
    %64 = tpu.matmul %62, %63, %cst_38 {dimension_numbers = #tpu.dot_dimension_numbers<[1], [0], [0], [1], [0, 0, 1, 1], [], []>} : vector<8x8xbf16>, vector<8x8xbf16>, vector<8x8xf32> -> vector<8x8xf32>
    %c0_39 = arith.constant 0 : index
    %c8 = arith.constant 8 : index
    %65 = vector.load %arg17[%c0_39, %c8] : memref<8x32xf32, #tpu.memory_space<vmem>>, vector<8x8xf32>
    tpu.vector_store %arg17[%c0_39, %c8], %64 {strides = array<i32>} : memref<8x32xf32, #tpu.memory_space<vmem>>, vector<8x8xf32>,
    %c2 = arith.constant 2 : index
    %c0_40 = arith.constant 0 : index
    %c0_41 = arith.constant 0 : index
    %66 = vector.load %arg3[%c2, %c0_40, %c0_41] : memref<4x32x8xbf16, #tpu.memory_space<vmem>>, vector<1x32x8xbf16>
    %67 = vector.shape_cast %66 : vector<1x32x8xbf16> to vector<32x8xbf16>
    %cst_42 = arith.constant dense<0.000000e+00> : vector<8x8xf32>
    %68 = tpu.matmul %6, %67, %cst_42 {dimension_numbers = #tpu.dot_dimension_numbers<[1], [0], [0], [1], [0, 0, 1, 1], [], []>} : vector<8x32xbf16>, vector<32x8xbf16>, vector<8x8xf32> -> vector<8x8xf32>
    %c2_43 = arith.constant 2 : index
    %c0_44 = arith.constant 0 : index
    %c0_45 = arith.constant 0 : index
    %69 = vector.load %arg4[%c2_43, %c0_44, %c0_45] : memref<4x32x8xbf16, #tpu.memory_space<vmem>>, vector<1x32x8xbf16>
    %70 = vector.shape_cast %69 : vector<1x32x8xbf16> to vector<32x8xbf16>
    %cst_46 = arith.constant dense<0.000000e+00> : vector<8x8xf32>
    %71 = tpu.matmul %7, %70, %cst_46 {dimension_numbers = #tpu.dot_dimension_numbers<[1], [0], [0], [1], [0, 0, 1, 1], [], []>} : vector<8x32xbf16>, vector<32x8xbf16>, vector<8x8xf32> -> vector<8x8xf32>
    %c2_47 = arith.constant 2 : index
    %c0_48 = arith.constant 0 : index
    %c0_49 = arith.constant 0 : index
    %72 = vector.load %arg5[%c2_47, %c0_48, %c0_49] : memref<4x32x8xbf16, #tpu.memory_space<vmem>>, vector<1x32x8xbf16>
    %73 = vector.shape_cast %72 : vector<1x32x8xbf16> to vector<32x8xbf16>
    %cst_50 = arith.constant dense<0.000000e+00> : vector<8x8xf32>
    %74 = tpu.matmul %7, %73, %cst_50 {dimension_numbers = #tpu.dot_dimension_numbers<[1], [0], [0], [1], [0, 0, 1, 1], [], []>} : vector<8x32xbf16>, vector<32x8xbf16>, vector<8x8xf32> -> vector<8x8xf32>
    %75 = arith.truncf %68 : vector<8x8xf32> to vector<8x8xbf16>
    %76 = arith.truncf %71 : vector<8x8xf32> to vector<8x8xbf16>
    %cst_51 = arith.constant dense<0.000000e+00> : vector<8x8xf32>
    %77 = tpu.matmul %75, %76, %cst_51 {dimension_numbers = #tpu.dot_dimension_numbers<[1], [1], [0], [0], [0, 0, 1, 0], [], []>} : vector<8x8xbf16>, vector<8x8xbf16>, vector<8x8xf32> -> vector<8x8xf32>
    %cst_52 = arith.constant 0.353553385 : f32
    %78 = vector.broadcast %cst_52 : f32 to vector<8x8xf32>
    %79 = arith.mulf %77, %78 : vector<8x8xf32>
    %80 = arith.addf %79, %5 : vector<8x8xf32>
    %cst_53 = arith.constant dense<0xFF800000> : vector<8xf32>
    %81 = vector.multi_reduction <maximumf>, %80, %cst_53 [1] : vector<8x8xf32> to vector<8xf32>
    %82 = vector.shape_cast %81 : vector<8xf32> to vector<8x1xf32>
    %83 = vector.broadcast %82 : vector<8x1xf32> to vector<8x8xf32>
    %84 = arith.subf %80, %83 : vector<8x8xf32>
    %85 = math.exp %84 : vector<8x8xf32>
    %cst_54 = arith.constant dense<0.000000e+00> : vector<8xf32>
    %86 = vector.multi_reduction <add>, %85, %cst_54 [1] : vector<8x8xf32> to vector<8xf32>
    %87 = vector.shape_cast %86 : vector<8xf32> to vector<8x1xf32>
    %88 = tpu.reciprocal %87 {approx = true} : vector<8x1xf32> -> vector<8x1xf32>
    %89 = vector.broadcast %88 : vector<8x1xf32> to vector<8x8xf32>
    %90 = arith.mulf %85, %89 : vector<8x8xf32>
    %91 = arith.truncf %90 : vector<8x8xf32> to vector<8x8xbf16>
    %92 = arith.truncf %74 : vector<8x8xf32> to vector<8x8xbf16>
    %cst_55 = arith.constant dense<0.000000e+00> : vector<8x8xf32>
    %93 = tpu.matmul %91, %92, %cst_55 {dimension_numbers = #tpu.dot_dimension_numbers<[1], [0], [0], [1], [0, 0, 1, 1], [], []>} : vector<8x8xbf16>, vector<8x8xbf16>, vector<8x8xf32> -> vector<8x8xf32>
    %c0_56 = arith.constant 0 : index
    %c16 = arith.constant 16 : index
    %94 = vector.load %arg17[%c0_56, %c16] : memref<8x32xf32, #tpu.memory_space<vmem>>, vector<8x8xf32>
    tpu.vector_store %arg17[%c0_56, %c16], %93 {strides = array<i32>} : memref<8x32xf32, #tpu.memory_space<vmem>>, vector<8x8xf32>,
    %c3 = arith.constant 3 : index
    %c0_57 = arith.constant 0 : index
    %c0_58 = arith.constant 0 : index
    %95 = vector.load %arg3[%c3, %c0_57, %c0_58] : memref<4x32x8xbf16, #tpu.memory_space<vmem>>, vector<1x32x8xbf16>
    %96 = vector.shape_cast %95 : vector<1x32x8xbf16> to vector<32x8xbf16>
    %cst_59 = arith.constant dense<0.000000e+00> : vector<8x8xf32>
    %97 = tpu.matmul %6, %96, %cst_59 {dimension_numbers = #tpu.dot_dimension_numbers<[1], [0], [0], [1], [0, 0, 1, 1], [], []>} : vector<8x32xbf16>, vector<32x8xbf16>, vector<8x8xf32> -> vector<8x8xf32>
    %c3_60 = arith.constant 3 : index
    %c0_61 = arith.constant 0 : index
    %c0_62 = arith.constant 0 : index
    %98 = vector.load %arg4[%c3_60, %c0_61, %c0_62] : memref<4x32x8xbf16, #tpu.memory_space<vmem>>, vector<1x32x8xbf16>
    %99 = vector.shape_cast %98 : vector<1x32x8xbf16> to vector<32x8xbf16>
    %cst_63 = arith.constant dense<0.000000e+00> : vector<8x8xf32>
    %100 = tpu.matmul %7, %99, %cst_63 {dimension_numbers = #tpu.dot_dimension_numbers<[1], [0], [0], [1], [0, 0, 1, 1], [], []>} : vector<8x32xbf16>, vector<32x8xbf16>, vector<8x8xf32> -> vector<8x8xf32>
    %c3_64 = arith.constant 3 : index
    %c0_65 = arith.constant 0 : index
    %c0_66 = arith.constant 0 : index
    %101 = vector.load %arg5[%c3_64, %c0_65, %c0_66] : memref<4x32x8xbf16, #tpu.memory_space<vmem>>, vector<1x32x8xbf16>
    %102 = vector.shape_cast %101 : vector<1x32x8xbf16> to vector<32x8xbf16>
    %cst_67 = arith.constant dense<0.000000e+00> : vector<8x8xf32>
    %103 = tpu.matmul %7, %102, %cst_67 {dimension_numbers = #tpu.dot_dimension_numbers<[1], [0], [0], [1], [0, 0, 1, 1], [], []>} : vector<8x32xbf16>, vector<32x8xbf16>, vector<8x8xf32> -> vector<8x8xf32>
    %104 = arith.truncf %97 : vector<8x8xf32> to vector<8x8xbf16>
    %105 = arith.truncf %100 : vector<8x8xf32> to vector<8x8xbf16>
    %cst_68 = arith.constant dense<0.000000e+00> : vector<8x8xf32>
    %106 = tpu.matmul %104, %105, %cst_68 {dimension_numbers = #tpu.dot_dimension_numbers<[1], [1], [0], [0], [0, 0, 1, 0], [], []>} : vector<8x8xbf16>, vector<8x8xbf16>, vector<8x8xf32> -> vector<8x8xf32>
    %cst_69 = arith.constant 0.353553385 : f32
    %107 = vector.broadcast %cst_69 : f32 to vector<8x8xf32>
    %108 = arith.mulf %106, %107 : vector<8x8xf32>
    %109 = arith.addf %108, %5 : vector<8x8xf32>
    %cst_70 = arith.constant dense<0xFF800000> : vector<8xf32>
    %110 = vector.multi_reduction <maximumf>, %109, %cst_70 [1] : vector<8x8xf32> to vector<8xf32>
    %111 = vector.shape_cast %110 : vector<8xf32> to vector<8x1xf32>
    %112 = vector.broadcast %111 : vector<8x1xf32> to vector<8x8xf32>
    %113 = arith.subf %109, %112 : vector<8x8xf32>
    %114 = math.exp %113 : vector<8x8xf32>
    %cst_71 = arith.constant dense<0.000000e+00> : vector<8xf32>
    %115 = vector.multi_reduction <add>, %114, %cst_71 [1] : vector<8x8xf32> to vector<8xf32>
    %116 = vector.shape_cast %115 : vector<8xf32> to vector<8x1xf32>
    %117 = tpu.reciprocal %116 {approx = true} : vector<8x1xf32> -> vector<8x1xf32>
    %118 = vector.broadcast %117 : vector<8x1xf32> to vector<8x8xf32>
    %119 = arith.mulf %114, %118 : vector<8x8xf32>
    %120 = arith.truncf %119 : vector<8x8xf32> to vector<8x8xbf16>
    %121 = arith.truncf %103 : vector<8x8xf32> to vector<8x8xbf16>
    %cst_72 = arith.constant dense<0.000000e+00> : vector<8x8xf32>
    %122 = tpu.matmul %120, %121, %cst_72 {dimension_numbers = #tpu.dot_dimension_numbers<[1], [0], [0], [1], [0, 0, 1, 1], [], []>} : vector<8x8xbf16>, vector<8x8xbf16>, vector<8x8xf32> -> vector<8x8xf32>
    %c0_73 = arith.constant 0 : index
    %c24 = arith.constant 24 : index
    %123 = vector.load %arg17[%c0_73, %c24] : memref<8x32xf32, #tpu.memory_space<vmem>>, vector<8x8xf32>
    tpu.vector_store %arg17[%c0_73, %c24], %122 {strides = array<i32>} : memref<8x32xf32, #tpu.memory_space<vmem>>, vector<8x8xf32>,
    %c0_74 = arith.constant 0 : index
    %c0_75 = arith.constant 0 : index
    %124 = vector.load %arg17[%c0_74, %c0_75] : memref<8x32xf32, #tpu.memory_space<vmem>>, vector<8x32xf32>
    %125 = arith.truncf %124 : vector<8x32xf32> to vector<8x32xbf16>
    %c0_76 = arith.constant 0 : index
    %c0_77 = arith.constant 0 : index
    %126 = vector.load %arg6[%c0_76, %c0_77] : memref<32x32xbf16, #tpu.memory_space<vmem>>, vector<32x32xbf16>
    %cst_78 = arith.constant dense<0.000000e+00> : vector<8x32xf32>
    %127 = tpu.matmul %125, %126, %cst_78 {dimension_numbers = #tpu.dot_dimension_numbers<[1], [0], [0], [1], [0, 0, 1, 1], [], []>} : vector<8x32xbf16>, vector<32x32xbf16>, vector<8x32xf32> -> vector<8x32xf32>
    %c0_79 = arith.constant 0 : index
    %c0_80 = arith.constant 0 : index
    %128 = vector.load %arg7[%c0_79, %c0_80] : memref<1x32xf32, #tpu.memory_space<vmem>>, vector<1x32xf32>
    %129 = vector.broadcast %128 : vector<1x32xf32> to vector<8x32xf32>
    %130 = arith.addf %127, %129 : vector<8x32xf32>
    %131 = arith.addf %130, %1 : vector<8x32xf32>
    %c0_81 = arith.constant 0 : index
    %c0_82 = arith.constant 0 : index
    %132 = vector.load %arg8[%c0_81, %c0_82] : memref<1x32xf32, #tpu.memory_space<vmem>>, vector<1x32xf32>
    %c0_83 = arith.constant 0 : index
    %c0_84 = arith.constant 0 : index
    %133 = vector.load %arg9[%c0_83, %c0_84] : memref<1x32xf32, #tpu.memory_space<vmem>>, vector<1x32xf32>
    %cst_85 = arith.constant dense<0.000000e+00> : vector<8xf32>
    %134 = vector.multi_reduction <add>, %131, %cst_85 [1] : vector<8x32xf32> to vector<8xf32>
    %135 = vector.shape_cast %134 : vector<8xf32> to vector<8x1xf32>
    %cst_86 = arith.constant 3.200000e+01 : f32
    %136 = vector.broadcast %cst_86 : f32 to vector<8x1xf32>
    %137 = arith.divf %135, %136 : vector<8x1xf32>
    %138 = vector.broadcast %137 : vector<8x1xf32> to vector<8x32xf32>
    %139 = arith.subf %131, %138 : vector<8x32xf32>
    %140 = arith.mulf %139, %139 : vector<8x32xf32>
    %cst_87 = arith.constant dense<0.000000e+00> : vector<8xf32>
    %141 = vector.multi_reduction <add>, %140, %cst_87 [1] : vector<8x32xf32> to vector<8xf32>
    %142 = vector.shape_cast %141 : vector<8xf32> to vector<8x1xf32>
    %cst_88 = arith.constant 3.100000e+01 : f32
    %143 = vector.broadcast %cst_88 : f32 to vector<8x1xf32>
    %144 = arith.divf %142, %143 : vector<8x1xf32>
    %145 = math.sqrt %144 : vector<8x1xf32>
    %cst_89 = arith.constant 1.000000e-03 : f32
    %146 = vector.broadcast %cst_89 : f32 to vector<8x1xf32>
    %147 = arith.addf %145, %146 : vector<8x1xf32>
    %148 = vector.broadcast %147 : vector<8x1xf32> to vector<8x32xf32>
    %149 = arith.divf %139, %148 : vector<8x32xf32>
    %150 = vector.broadcast %132 : vector<1x32xf32> to vector<8x32xf32>
    %151 = arith.mulf %149, %150 : vector<8x32xf32>
    %152 = vector.broadcast %133 : vector<1x32xf32> to vector<8x32xf32>
    %153 = arith.addf %151, %152 : vector<8x32xf32>
    %154 = arith.truncf %153 : vector<8x32xf32> to vector<8x32xbf16>
    %c0_90 = arith.constant 0 : index
    %c0_91 = arith.constant 0 : index
    %155 = vector.load %arg10[%c0_90, %c0_91] : memref<32x64xbf16, #tpu.memory_space<vmem>>, vector<32x64xbf16>
    %cst_92 = arith.constant dense<0.000000e+00> : vector<8x64xf32>
    %156 = tpu.matmul %154, %155, %cst_92 {dimension_numbers = #tpu.dot_dimension_numbers<[1], [0], [0], [1], [0, 0, 1, 1], [], []>} : vector<8x32xbf16>, vector<32x64xbf16>, vector<8x64xf32> -> vector<8x64xf32>
    %c0_93 = arith.constant 0 : index
    %c0_94 = arith.constant 0 : index
    %157 = vector.load %arg11[%c0_93, %c0_94] : memref<1x64xf32, #tpu.memory_space<vmem>>, vector<1x64xf32>
    %158 = vector.broadcast %157 : vector<1x64xf32> to vector<8x64xf32>
    %159 = arith.addf %156, %158 : vector<8x64xf32>
    %cst_95 = arith.constant 0.000000e+00 : f32
    %160 = vector.broadcast %cst_95 : f32 to vector<8x64xf32>
    %161 = arith.maximumf %159, %160 : vector<8x64xf32>
    %162 = arith.truncf %161 : vector<8x64xf32> to vector<8x64xbf16>
    %c0_96 = arith.constant 0 : index
    %c0_97 = arith.constant 0 : index
    %163 = vector.load %arg12[%c0_96, %c0_97] : memref<64x32xbf16, #tpu.memory_space<vmem>>, vector<64x32xbf16>
    %cst_98 = arith.constant dense<0.000000e+00> : vector<8x32xf32>
    %164 = tpu.matmul %162, %163, %cst_98 {dimension_numbers = #tpu.dot_dimension_numbers<[1], [0], [0], [1], [0, 0, 1, 1], [], []>} : vector<8x64xbf16>, vector<64x32xbf16>, vector<8x32xf32> -> vector<8x32xf32>
    %c0_99 = arith.constant 0 : index
    %c0_100 = arith.constant 0 : index
    %165 = vector.load %arg13[%c0_99, %c0_100] : memref<1x32xf32, #tpu.memory_space<vmem>>, vector<1x32xf32>
    %166 = vector.broadcast %165 : vector<1x32xf32> to vector<8x32xf32>
    %167 = arith.addf %164, %166 : vector<8x32xf32>
    %168 = arith.addf %167, %153 : vector<8x32xf32>
    %c0_101 = arith.constant 0 : index
    %c0_102 = arith.constant 0 : index
    %169 = vector.load %arg14[%c0_101, %c0_102] : memref<1x32xf32, #tpu.memory_space<vmem>>, vector<1x32xf32>
    %c0_103 = arith.constant 0 : index
    %c0_104 = arith.constant 0 : index
    %170 = vector.load %arg15[%c0_103, %c0_104] : memref<1x32xf32, #tpu.memory_space<vmem>>, vector<1x32xf32>
    %cst_105 = arith.constant dense<0.000000e+00> : vector<8xf32>
    %171 = vector.multi_reduction <add>, %168, %cst_105 [1] : vector<8x32xf32> to vector<8xf32>
    %172 = vector.shape_cast %171 : vector<8xf32> to vector<8x1xf32>
    %cst_106 = arith.constant 3.200000e+01 : f32
    %173 = vector.broadcast %cst_106 : f32 to vector<8x1xf32>
    %174 = arith.divf %172, %173 : vector<8x1xf32>
    %175 = vector.broadcast %174 : vector<8x1xf32> to vector<8x32xf32>
    %176 = arith.subf %168, %175 : vector<8x32xf32>
    %177 = arith.mulf %176, %176 : vector<8x32xf32>
    %cst_107 = arith.constant dense<0.000000e+00> : vector<8xf32>
    %178 = vector.multi_reduction <add>, %177, %cst_107 [1] : vector<8x32xf32> to vector<8xf32>
    %179 = vector.shape_cast %178 : vector<8xf32> to vector<8x1xf32>
    %cst_108 = arith.constant 3.100000e+01 : f32
    %180 = vector.broadcast %cst_108 : f32 to vector<8x1xf32>
    %181 = arith.divf %179, %180 : vector<8x1xf32>
    %182 = math.sqrt %181 : vector<8x1xf32>
    %cst_109 = arith.constant 1.000000e-03 : f32
    %183 = vector.broadcast %cst_109 : f32 to vector<8x1xf32>
    %184 = arith.addf %182, %183 : vector<8x1xf32>
    %185 = vector.broadcast %184 : vector<8x1xf32> to vector<8x32xf32>
    %186 = arith.divf %176, %185 : vector<8x32xf32>
    %187 = vector.broadcast %169 : vector<1x32xf32> to vector<8x32xf32>
    %188 = arith.mulf %186, %187 : vector<8x32xf32>
    %189 = vector.broadcast %170 : vector<1x32xf32> to vector<8x32xf32>
    %190 = arith.addf %188, %189 : vector<8x32xf32>
    %c0_110 = arith.constant 0 : index
    %c0_111 = arith.constant 0 : index
    %c0_112 = arith.constant 0 : index
    %191 = vector.load %arg16[%c0_110, %c0_111, %c0_112] : memref<1x8x32xf32, #tpu.memory_space<vmem>>, vector<1x8x32xf32>
    %192 = vector.shape_cast %191 : vector<1x8x32xf32> to vector<8x32xf32>
    %193 = vector.shape_cast %190 : vector<8x32xf32> to vector<1x8x32xf32>
    tpu.vector_store %arg16[%c0_110, %c0_111, %c0_112], %193 {strides = array<i32>} : memref<1x8x32xf32, #tpu.memory_space<vmem>>, vector<1x8x32xf32>,
    return
  }
  func.func @transform_0(%arg0: i32) -> (i32, i32, i32) {
    %c0_i32 = arith.constant 0 : i32
    %c0_i32_0 = arith.constant 0 : i32
    %c0_i32_1 = arith.constant 0 : i32
    return %arg0, %c0_i32, %c0_i32_0 : i32, i32, i32
  }
  func.func @transform_1(%arg0: i32) -> (i32, i32, i32) {
    %c0_i32 = arith.constant 0 : i32
    %c0_i32_0 = arith.constant 0 : i32
    %c0_i32_1 = arith.constant 0 : i32
    return %arg0, %c0_i32, %c0_i32_0 : i32, i32, i32
  }
  func.func @transform_2(%arg0: i32) -> (i32, i32, i32) {
    %c0_i32 = arith.constant 0 : i32
    %c0_i32_0 = arith.constant 0 : i32
    %c0_i32_1 = arith.constant 0 : i32
    %c0_i32_2 = arith.constant 0 : i32
    return %c0_i32, %c0_i32_0, %c0_i32_1 : i32, i32, i32
  }
  func.func @transform_3(%arg0: i32) -> (i32, i32, i32) {
    %c0_i32 = arith.constant 0 : i32
    %c0_i32_0 = arith.constant 0 : i32
    %c0_i32_1 = arith.constant 0 : i32
    %c0_i32_2 = arith.constant 0 : i32
    return %c0_i32, %c0_i32_0, %c0_i32_1 : i32, i32, i32
  }
  func.func @transform_4(%arg0: i32) -> (i32, i32, i32) {
    %c0_i32 = arith.constant 0 : i32
    %c0_i32_0 = arith.constant 0 : i32
    %c0_i32_1 = arith.constant 0 : i32
    %c0_i32_2 = arith.constant 0 : i32
    return %c0_i32, %c0_i32_0, %c0_i32_1 : i32, i32, i32
  }
  func.func @transform_5(%arg0: i32) -> (i32, i32) {
    %c0_i32 = arith.constant 0 : i32
    %c0_i32_0 = arith.constant 0 : i32
    %c0_i32_1 = arith.constant 0 : i32
    return %c0_i32, %c0_i32_0 : i32, i32
  }
  func.func @transform_6(%arg0: i32) -> (i32, i32) {
    %c0_i32 = arith.constant 0 : i32
    %c0_i32_0 = arith.constant 0 : i32
    %c0_i32_1 = arith.constant 0 : i32
    return %c0_i32, %c0_i32_0 : i32, i32
  }
  func.func @transform_7(%arg0: i32) -> (i32, i32) {
    %c0_i32 = arith.constant 0 : i32
    %c0_i32_0 = arith.constant 0 : i32
    %c0_i32_1 = arith.constant 0 : i32
    return %c0_i32, %c0_i32_0 : i32, i32
  }
  func.func @transform_8(%arg0: i32) -> (i32, i32) {
    %c0_i32 = arith.constant 0 : i32
    %c0_i32_0 = arith.constant 0 : i32
    %c0_i32_1 = arith.constant 0 : i32
    return %c0_i32, %c0_i32_0 : i32, i32
  }
  func.func @transform_9(%arg0: i32) -> (i32, i32) {
    %c0_i32 = arith.constant 0 : i32
    %c0_i32_0 = arith.constant 0 : i32
    %c0_i32_1 = arith.constant 0 : i32
    return %c0_i32, %c0_i32_0 : i32, i32
  }
  func.func @transform_10(%arg0: i32) -> (i32, i32) {
    %c0_i32 = arith.constant 0 : i32
    %c0_i32_0 = arith.constant 0 : i32
    %c0_i32_1 = arith.constant 0 : i32
    return %c0_i32, %c0_i32_0 : i32, i32
  }
  func.func @transform_11(%arg0: i32) -> (i32, i32) {
    %c0_i32 = arith.constant 0 : i32
    %c0_i32_0 = arith.constant 0 : i32
    %c0_i32_1 = arith.constant 0 : i32
    return %c0_i32, %c0_i32_0 : i32, i32
  }
  func.func @transform_12(%arg0: i32) -> (i32, i32) {
    %c0_i32 = arith.constant 0 : i32
    %c0_i32_0 = arith.constant 0 : i32
    %c0_i32_1 = arith.constant 0 : i32
    return %c0_i32, %c0_i32_0 : i32, i32
  }
  func.func @transform_13(%arg0: i32) -> (i32, i32) {
    %c0_i32 = arith.constant 0 : i32
    %c0_i32_0 = arith.constant 0 : i32
    %c0_i32_1 = arith.constant 0 : i32
    return %c0_i32, %c0_i32_0 : i32, i32
  }
  func.func @transform_14(%arg0: i32) -> (i32, i32) {
    %c0_i32 = arith.constant 0 : i32
    %c0_i32_0 = arith.constant 0 : i32
    %c0_i32_1 = arith.constant 0 : i32
    return %c0_i32, %c0_i32_0 : i32, i32
  }
  func.func @transform_15(%arg0: i32) -> (i32, i32, i32) {
    %c0_i32 = arith.constant 0 : i32
    %c0_i32_0 = arith.constant 0 : i32
    %c0_i32_1 = arith.constant 0 : i32
    return %arg0, %c0_i32, %c0_i32_0 : i32, i32, i32
  }
}

</mosaic_0001>

<llo_original>
// kernel: tpu_custom_call.1
$region0: #{tpu_custom_call.1}
  #allocation0 [shape = 'u32[]', space=smem, size = 0x4, offset = 0x4, fixed_abs, tag = 'smem constant byte address 0x4 - core index']
  #allocation1 [shape = 'u32[144,128]{1,0:T(1,128)}', space=vmem, size = 0x12000, scoped, tag = 'internal scratch']
  #allocation2 [shape = 'f32[8,32]{1,0:T(8,128)}', space=vmem, size = 0x1000, scoped, tag = 'scratch operand']
  %s0 = inlined_call_operand.vmem [shape: f32[2,8,32], index: 0, kind: input, shape index: {}]
  %s1 = inlined_call_operand.vmem [shape: f32[2,1,8], index: 1, kind: input, shape index: {}]
  %s2 = inlined_call_operand.vmem [shape: bf16[4,32,8], index: 2, kind: input, shape index: {}]
  %s3 = inlined_call_operand.vmem [shape: bf16[4,32,8], index: 3, kind: input, shape index: {}]
  %s4 = inlined_call_operand.vmem [shape: bf16[4,32,8], index: 4, kind: input, shape index: {}]
  %s5 = inlined_call_operand.vmem [shape: bf16[32,32], index: 5, kind: input, shape index: {}]
  %s6 = inlined_call_operand.vmem [shape: f32[1,32], index: 6, kind: input, shape index: {}]
  %s7 = inlined_call_operand.vmem [shape: f32[1,32], index: 7, kind: input, shape index: {}]
  %s8 = inlined_call_operand.vmem [shape: f32[1,32], index: 8, kind: input, shape index: {}]
  %s9 = inlined_call_operand.vmem [shape: bf16[32,64], index: 9, kind: input, shape index: {}]
  %s10 = inlined_call_operand.vmem [shape: f32[1,64], index: 10, kind: input, shape index: {}]
  %s11 = inlined_call_operand.vmem [shape: bf16[64,32], index: 11, kind: input, shape index: {}]
  %s12 = inlined_call_operand.vmem [shape: f32[1,32], index: 12, kind: input, shape index: {}]
  %s13 = inlined_call_operand.vmem [shape: f32[1,32], index: 13, kind: input, shape index: {}]
  %s14 = inlined_call_operand.vmem [shape: f32[1,32], index: 14, kind: input, shape index: {}]
  %s15 = inlined_call_operand.hbm [shape: f32[2,8,32], index: 15, kind: output, shape index: {}]
  %s16 = sld [smem:[#allocation0]]
  $region93: #{tpu_custom_call.1} parent=0
    _
  %s18 = ssub.s32 1, %s16
  %s19 = scalar_select 0, %s18, %s16
  $region1: #{tpu_custom_call.1} parent=0
    #allocation3 [shape = 'u8[8192]{0}', space=vmem, size = 0x2000, scoped, tag = 'output window, operand 0']
    #allocation4 [shape = 's32[2]{0}', space=sflag, size = 0x8, scoped, tag = 'scoped memory for tpu_custom_call.1']
    %20 = vsyncpa [#allocation4], 0
    %s21 = scalar_lea.sflag [#allocation4], 1
    %22 = vsyncpa %s21, 0
    loop: start=0, step=1, limit=4
    $region2: #{tpu_custom_call.1} parent=1 // loop_pre_header
      _
    $region3: #{tpu_custom_call.1} parent=1 // loop_header
      %s24 = sphi 0, %s28
      %p25 = scmp.ge.s32.totalorder %s24, 4
      %s34 = sphi 0, %s36
      %s37 = sphi 0, %s34
      %s38 = sphi 0, %s37
      %s54 = sphi 0, %s38
      %s60 = sphi 0, %s62
      %s63 = sphi 0, %s60
      %s64 = sphi 0, %s63
      %s80 = sphi 0, %s64
      %s84 = sphi 0, %s84
      %s86 = sphi 0, %s84
      %s87 = sphi 0, %s86
      %s101 = sphi 0, %s87
      %s105 = sphi 0, %s105
      %s107 = sphi 0, %s105
      %s108 = sphi 0, %s107
      %s122 = sphi 0, %s108
      %s126 = sphi 0, %s126
      %s128 = sphi 0, %s126
      %s129 = sphi 0, %s128
      %s143 = sphi 0, %s129
      %s147 = sphi 0, %s147
      %s149 = sphi 0, %s147
      %s150 = sphi 0, %s149
      %s164 = sphi 0, %s150
      %s168 = sphi 0, %s168
      %s170 = sphi 0, %s168
      %s171 = sphi 0, %s170
      %s185 = sphi 0, %s171
      %s189 = sphi 0, %s189
      %s191 = sphi 0, %s189
      %s192 = sphi 0, %s191
      %s206 = sphi 0, %s192
      %s210 = sphi 0, %s210
      %s212 = sphi 0, %s210
      %s213 = sphi 0, %s212
      %s227 = sphi 0, %s213
      %s231 = sphi 0, %s231
      %s233 = sphi 0, %s231
      %s234 = sphi 0, %s233
      %s248 = sphi 0, %s234
      %s252 = sphi 0, %s252
      %s254 = sphi 0, %s252
      %s255 = sphi 0, %s254
      %s269 = sphi 0, %s255
      %s273 = sphi 0, %s273
      %s275 = sphi 0, %s273
      %s276 = sphi 0, %s275
      %s290 = sphi 0, %s276
      %s294 = sphi 0, %s294
      %s296 = sphi 0, %s294
      %s297 = sphi 0, %s296
      %s311 = sphi 0, %s297
      %s315 = sphi 0, %s315
      %s317 = sphi 0, %s315
      %s318 = sphi 0, %s317
      %s332 = sphi 0, %s318
      %s336 = sphi 0, %s336
      %s338 = sphi 0, %s336
      %s339 = sphi 0, %s338
      %s353 = sphi 0, %s339
      %s359 = sphi 0, %s361
      %s362 = sphi 0, %s359
      %s363 = sphi 0, %s362
      %s379 = sphi 0, %s363
    $region4: #{tpu_custom_call.1} parent=1 // loop_header_branch
      %27 = sbr.rel (%p25) target = $region8
    $region5: #{tpu_custom_call.1} parent=1 // loop_body
      %s29 = ssub.s32 %s24, 1
      %s30 = ssub.s32 %s24, 2
      %s31 = sadd.s32 %s24, 1
      %s32 = ssub.s32 %s24, %s31
      %p33 = scmp.eq.s32.totalorder %s32, 0
      %s35 = sadd.s32 %s34, 1
      %s36 = scalar_select %p33, %s34, %s35
      %p39 = pneg %p33
      %p40 = scmp.eq.s32.totalorder %s24, 1
      %p41 = por %p39, %p40
      %p42 = scmp.ne.s32.totalorder %s34, %s37
      %p43 = scmp.eq.s32.totalorder %s24, 0
      %p44 = por %p42, %p43
      %p45 = scmp.ne.s32.totalorder %s34, %s37
      %p46 = scmp.eq.s32.totalorder %s29, 1
      %p47 = por %p45, %p46
      %p48 = scmp.ne.s32.totalorder %s37, %s38
      %p49 = scmp.eq.s32.totalorder %s29, 0
      %p50 = por %p48, %p49
      %p51 = scmp.ne.s32.totalorder %s37, %s38
      %p52 = scmp.eq.s32.totalorder %s30, 1
      %p53 = por %p51, %p52
      %p55 = scmp.ne.s32.totalorder %s38, %s54
      %p56 = scmp.eq.s32.totalorder %s30, 0
      %p57 = por %p55, %p56
      %s58 = ssub.s32 %s24, %s31
      %p59 = scmp.eq.s32.totalorder %s58, 0
      %s61 = sadd.s32 %s60, 1
      %s62 = scalar_select %p59, %s60, %s61
      %p65 = pneg %p59
      %p66 = scmp.eq.s32.totalorder %s24, 1
      %p67 = por %p65, %p66
      %p68 = scmp.ne.s32.totalorder %s60, %s63
      %p69 = scmp.eq.s32.totalorder %s24, 0
      %p70 = por %p68, %p69
      %p71 = scmp.ne.s32.totalorder %s60, %s63
      %p72 = scmp.eq.s32.totalorder %s29, 1
      %p73 = por %p71, %p72
      %p74 = scmp.ne.s32.totalorder %s63, %s64
      %p75 = scmp.eq.s32.totalorder %s29, 0
      %p76 = por %p74, %p75
      %p77 = scmp.ne.s32.totalorder %s63, %s64
      %p78 = scmp.eq.s32.totalorder %s30, 1
      %p79 = por %p77, %p78
      %p81 = scmp.ne.s32.totalorder %s64, %s80
      %p82 = scmp.eq.s32.totalorder %s30, 0
      %p83 = por %p81, %p82
      %s85 = sadd.s32 %s84, 1
      %p88 = scmp.eq.s32.totalorder %s24, 1
      %p89 = scmp.ne.s32.totalorder %s84, %s86
      %p90 = scmp.eq.s32.totalorder %s24, 0
      %p91 = por %p89, %p90
      %p92 = scmp.ne.s32.totalorder %s84, %s86
      %p93 = scmp.eq.s32.totalorder %s29, 1
      %p94 = por %p92, %p93
      %p95 = scmp.ne.s32.totalorder %s86, %s87
      %p96 = scmp.eq.s32.totalorder %s29, 0
      %p97 = por %p95, %p96
      %p98 = scmp.ne.s32.totalorder %s86, %s87
      %p99 = scmp.eq.s32.totalorder %s30, 1
      %p100 = por %p98, %p99
      %p102 = scmp.ne.s32.totalorder %s87, %s101
      %p103 = scmp.eq.s32.totalorder %s30, 0
      %p104 = por %p102, %p103
      %s106 = sadd.s32 %s105, 1
      %p109 = scmp.eq.s32.totalorder %s24, 1
      %p110 = scmp.ne.s32.totalorder %s105, %s107
      %p111 = scmp.eq.s32.totalorder %s24, 0
      %p112 = por %p110, %p111
      %p113 = scmp.ne.s32.totalorder %s105, %s107
      %p114 = scmp.eq.s32.totalorder %s29, 1
      %p115 = por %p113, %p114
      %p116 = scmp.ne.s32.totalorder %s107, %s108
      %p117 = scmp.eq.s32.totalorder %s29, 0
      %p118 = por %p116, %p117
      %p119 = scmp.ne.s32.totalorder %s107, %s108
      %p120 = scmp.eq.s32.totalorder %s30, 1
      %p121 = por %p119, %p120
      %p123 = scmp.ne.s32.totalorder %s108, %s122
      %p124 = scmp.eq.s32.totalorder %s30, 0
      %p125 = por %p123, %p124
      %s127 = sadd.s32 %s126, 1
      %p130 = scmp.eq.s32.totalorder %s24, 1
      %p131 = scmp.ne.s32.totalorder %s126, %s128
      %p132 = scmp.eq.s32.totalorder %s24, 0
      %p133 = por %p131, %p132
      %p134 = scmp.ne.s32.totalorder %s126, %s128
      %p135 = scmp.eq.s32.totalorder %s29, 1
      %p136 = por %p134, %p135
      %p137 = scmp.ne.s32.totalorder %s128, %s129
      %p138 = scmp.eq.s32.totalorder %s29, 0
      %p139 = por %p137, %p138
      %p140 = scmp.ne.s32.totalorder %s128, %s129
      %p141 = scmp.eq.s32.totalorder %s30, 1
      %p142 = por %p140, %p141
      %p144 = scmp.ne.s32.totalorder %s129, %s143
      %p145 = scmp.eq.s32.totalorder %s30, 0
      %p146 = por %p144, %p145
      %s148 = sadd.s32 %s147, 1
      %p151 = scmp.eq.s32.totalorder %s24, 1
      %p152 = scmp.ne.s32.totalorder %s147, %s149
      %p153 = scmp.eq.s32.totalorder %s24, 0
      %p154 = por %p152, %p153
      %p155 = scmp.ne.s32.totalorder %s147, %s149
      %p156 = scmp.eq.s32.totalorder %s29, 1
      %p157 = por %p155, %p156
      %p158 = scmp.ne.s32.totalorder %s149, %s150
      %p159 = scmp.eq.s32.totalorder %s29, 0
      %p160 = por %p158, %p159
      %p161 = scmp.ne.s32.totalorder %s149, %s150
      %p162 = scmp.eq.s32.totalorder %s30, 1
      %p163 = por %p161, %p162
      %p165 = scmp.ne.s32.totalorder %s150, %s164
      %p166 = scmp.eq.s32.totalorder %s30, 0
      %p167 = por %p165, %p166
      %s169 = sadd.s32 %s168, 1
      %p172 = scmp.eq.s32.totalorder %s24, 1
      %p173 = scmp.ne.s32.totalorder %s168, %s170
      %p174 = scmp.eq.s32.totalorder %s24, 0
      %p175 = por %p173, %p174
      %p176 = scmp.ne.s32.totalorder %s168, %s170
      %p177 = scmp.eq.s32.totalorder %s29, 1
      %p178 = por %p176, %p177
      %p179 = scmp.ne.s32.totalorder %s170, %s171
      %p180 = scmp.eq.s32.totalorder %s29, 0
      %p181 = por %p179, %p180
      %p182 = scmp.ne.s32.totalorder %s170, %s171
      %p183 = scmp.eq.s32.totalorder %s30, 1
      %p184 = por %p182, %p183
      %p186 = scmp.ne.s32.totalorder %s171, %s185
      %p187 = scmp.eq.s32.totalorder %s30, 0
      %p188 = por %p186, %p187
      %s190 = sadd.s32 %s189, 1
      %p193 = scmp.eq.s32.totalorder %s24, 1
      %p194 = scmp.ne.s32.totalorder %s189, %s191
      %p195 = scmp.eq.s32.totalorder %s24, 0
      %p196 = por %p194, %p195
      %p197 = scmp.ne.s32.totalorder %s189, %s191
      %p198 = scmp.eq.s32.totalorder %s29, 1
      %p199 = por %p197, %p198
      %p200 = scmp.ne.s32.totalorder %s191, %s192
      %p201 = scmp.eq.s32.totalorder %s29, 0
      %p202 = por %p200, %p201
      %p203 = scmp.ne.s32.totalorder %s191, %s192
      %p204 = scmp.eq.s32.totalorder %s30, 1
      %p205 = por %p203, %p204
      %p207 = scmp.ne.s32.totalorder %s192, %s206
      %p208 = scmp.eq.s32.totalorder %s30, 0
      %p209 = por %p207, %p208
      %s211 = sadd.s32 %s210, 1
      %p214 = scmp.eq.s32.totalorder %s24, 1
      %p215 = scmp.ne.s32.totalorder %s210, %s212
      %p216 = scmp.eq.s32.totalorder %s24, 0
      %p217 = por %p215, %p216
      %p218 = scmp.ne.s32.totalorder %s210, %s212
      %p219 = scmp.eq.s32.totalorder %s29, 1
      %p220 = por %p218, %p219
      %p221 = scmp.ne.s32.totalorder %s212, %s213
      %p222 = scmp.eq.s32.totalorder %s29, 0
      %p223 = por %p221, %p222
      %p224 = scmp.ne.s32.totalorder %s212, %s213
      %p225 = scmp.eq.s32.totalorder %s30, 1
      %p226 = por %p224, %p225
      %p228 = scmp.ne.s32.totalorder %s213, %s227
      %p229 = scmp.eq.s32.totalorder %s30, 0
      %p230 = por %p228, %p229
      %s232 = sadd.s32 %s231, 1
      %p235 = scmp.eq.s32.totalorder %s24, 1
      %p236 = scmp.ne.s32.totalorder %s231, %s233
      %p237 = scmp.eq.s32.totalorder %s24, 0
      %p238 = por %p236, %p237
      %p239 = scmp.ne.s32.totalorder %s231, %s233
      %p240 = scmp.eq.s32.totalorder %s29, 1
      %p241 = por %p239, %p240
      %p242 = scmp.ne.s32.totalorder %s233, %s234
      %p243 = scmp.eq.s32.totalorder %s29, 0
      %p244 = por %p242, %p243
      %p245 = scmp.ne.s32.totalorder %s233, %s234
      %p246 = scmp.eq.s32.totalorder %s30, 1
      %p247 = por %p245, %p246
      %p249 = scmp.ne.s32.totalorder %s234, %s248
      %p250 = scmp.eq.s32.totalorder %s30, 0
      %p251 = por %p249, %p250
      %s253 = sadd.s32 %s252, 1
      %p256 = scmp.eq.s32.totalorder %s24, 1
      %p257 = scmp.ne.s32.totalorder %s252, %s254
      %p258 = scmp.eq.s32.totalorder %s24, 0
      %p259 = por %p257, %p258
      %p260 = scmp.ne.s32.totalorder %s252, %s254
      %p261 = scmp.eq.s32.totalorder %s29, 1
      %p262 = por %p260, %p261
      %p263 = scmp.ne.s32.totalorder %s254, %s255
      %p264 = scmp.eq.s32.totalorder %s29, 0
      %p265 = por %p263, %p264
      %p266 = scmp.ne.s32.totalorder %s254, %s255
      %p267 = scmp.eq.s32.totalorder %s30, 1
      %p268 = por %p266, %p267
      %p270 = scmp.ne.s32.totalorder %s255, %s269
      %p271 = scmp.eq.s32.totalorder %s30, 0
      %p272 = por %p270, %p271
      %s274 = sadd.s32 %s273, 1
      %p277 = scmp.eq.s32.totalorder %s24, 1
      %p278 = scmp.ne.s32.totalorder %s273, %s275
      %p279 = scmp.eq.s32.totalorder %s24, 0
      %p280 = por %p278, %p279
      %p281 = scmp.ne.s32.totalorder %s273, %s275
      %p282 = scmp.eq.s32.totalorder %s29, 1
      %p283 = por %p281, %p282
      %p284 = scmp.ne.s32.totalorder %s275, %s276
      %p285 = scmp.eq.s32.totalorder %s29, 0
      %p286 = por %p284, %p285
      %p287 = scmp.ne.s32.totalorder %s275, %s276
      %p288 = scmp.eq.s32.totalorder %s30, 1
      %p289 = por %p287, %p288
      %p291 = scmp.ne.s32.totalorder %s276, %s290
      %p292 = scmp.eq.s32.totalorder %s30, 0
      %p293 = por %p291, %p292
      %s295 = sadd.s32 %s294, 1
      %p298 = scmp.eq.s32.totalorder %s24, 1
      %p299 = scmp.ne.s32.totalorder %s294, %s296
      %p300 = scmp.eq.s32.totalorder %s24, 0
      %p301 = por %p299, %p300
      %p302 = scmp.ne.s32.totalorder %s294, %s296
      %p303 = scmp.eq.s32.totalorder %s29, 1
      %p304 = por %p302, %p303
      %p305 = scmp.ne.s32.totalorder %s296, %s297
      %p306 = scmp.eq.s32.totalorder %s29, 0
      %p307 = por %p305, %p306
      %p308 = scmp.ne.s32.totalorder %s296, %s297
      %p309 = scmp.eq.s32.totalorder %s30, 1
      %p310 = por %p308, %p309
      %p312 = scmp.ne.s32.totalorder %s297, %s311
      %p313 = scmp.eq.s32.totalorder %s30, 0
      %p314 = por %p312, %p313
      %s316 = sadd.s32 %s315, 1
      %p319 = scmp.eq.s32.totalorder %s24, 1
      %p320 = scmp.ne.s32.totalorder %s315, %s317
      %p321 = scmp.eq.s32.totalorder %s24, 0
      %p322 = por %p320, %p321
      %p323 = scmp.ne.s32.totalorder %s315, %s317
      %p324 = scmp.eq.s32.totalorder %s29, 1
      %p325 = por %p323, %p324
      %p326 = scmp.ne.s32.totalorder %s317, %s318
      %p327 = scmp.eq.s32.totalorder %s29, 0
      %p328 = por %p326, %p327
      %p329 = scmp.ne.s32.totalorder %s317, %s318
      %p330 = scmp.eq.s32.totalorder %s30, 1
      %p331 = por %p329, %p330
      %p333 = scmp.ne.s32.totalorder %s318, %s332
      %p334 = scmp.eq.s32.totalorder %s30, 0
      %p335 = por %p333, %p334
      %s337 = sadd.s32 %s336, 1
      %p340 = scmp.eq.s32.totalorder %s24, 1
      %p341 = scmp.ne.s32.totalorder %s336, %s338
      %p342 = scmp.eq.s32.totalorder %s24, 0
      %p343 = por %p341, %p342
      %p344 = scmp.ne.s32.totalorder %s336, %s338
      %p345 = scmp.eq.s32.totalorder %s29, 1
      %p346 = por %p344, %p345
      %p347 = scmp.ne.s32.totalorder %s338, %s339
      %p348 = scmp.eq.s32.totalorder %s29, 0
      %p349 = por %p347, %p348
      %p350 = scmp.ne.s32.totalorder %s338, %s339
      %p351 = scmp.eq.s32.totalorder %s30, 1
      %p352 = por %p350, %p351
      %p354 = scmp.ne.s32.totalorder %s339, %s353
      %p355 = scmp.eq.s32.totalorder %s30, 0
      %p356 = por %p354, %p355
      %s357 = ssub.s32 %s24, %s31
      %p358 = scmp.eq.s32.totalorder %s357, 0
      %s360 = sadd.s32 %s359, 1
      %s361 = scalar_select %p358, %s359, %s360
      %p364 = pneg %p358
      %p365 = scmp.eq.s32.totalorder %s24, 1
      %p366 = por %p364, %p365
      %p367 = scmp.ne.s32.totalorder %s359, %s362
      %p368 = scmp.eq.s32.totalorder %s24, 0
      %p369 = por %p367, %p368
      %p370 = scmp.ne.s32.totalorder %s359, %s362
      %p371 = scmp.eq.s32.totalorder %s29, 1
      %p372 = por %p370, %p371
      %p373 = scmp.ne.s32.totalorder %s362, %s363
      %p374 = scmp.eq.s32.totalorder %s29, 0
      %p375 = por %p373, %p374
      %p376 = scmp.ne.s32.totalorder %s362, %s363
      %p377 = scmp.eq.s32.totalorder %s30, 1
      %p378 = por %p376, %p377
      %p380 = scmp.ne.s32.totalorder %s363, %s379
      %p381 = scmp.eq.s32.totalorder %s30, 0
      %p382 = por %p380, %p381
      %p383 = scmp.le.s32.totalorder 1, %s24
      %p384 = scmp.lt.s32.totalorder %s24, 3
      %p385 = pnand %p383, %p384
      %p386 = pneg %p385
      // Predicated region
      $region9: #{tpu_custom_call.1} parent=5 // pred_check
        _
      $region10: #{tpu_custom_call.1} parent=5 // pred_check_branch
        %388 = sbr.rel (%p385) target = $region12
      $region11: #{tpu_custom_call.1} parent=5 // pred_region
        %s389 = ssub.s32 %s24, 1
        // Predicated region
        $region13: #{tpu_custom_call.1} parent=11 // pred_check
          %p390 = pneg %p97
        $region14: #{tpu_custom_call.1} parent=11 // pred_check_branch
          %392 = sbr.rel (%p390) target = $region16
        $region15: #{tpu_custom_call.1} parent=11 // pred_region
          _
        $region16: #{tpu_custom_call.1} parent=11 // pred_fallthru
          _
        // Predicated region
        $region17: #{tpu_custom_call.1} parent=11 // pred_check
          %p393 = pneg %p118
        $region18: #{tpu_custom_call.1} parent=11 // pred_check_branch
          %395 = sbr.rel (%p393) target = $region20
        $region19: #{tpu_custom_call.1} parent=11 // pred_region
          _
        $region20: #{tpu_custom_call.1} parent=11 // pred_fallthru
          _
        // Predicated region
        $region21: #{tpu_custom_call.1} parent=11 // pred_check
          %p396 = pneg %p139
        $region22: #{tpu_custom_call.1} parent=11 // pred_check_branch
          %398 = sbr.rel (%p396) target = $region24
        $region23: #{tpu_custom_call.1} parent=11 // pred_region
          _
        $region24: #{tpu_custom_call.1} parent=11 // pred_fallthru
          _
        // Predicated region
        $region25: #{tpu_custom_call.1} parent=11 // pred_check
          %p399 = pneg %p160
        $region26: #{tpu_custom_call.1} parent=11 // pred_check_branch
          %401 = sbr.rel (%p399) target = $region28
        $region27: #{tpu_custom_call.1} parent=11 // pred_region
          _
        $region28: #{tpu_custom_call.1} parent=11 // pred_fallthru
          _
        // Predicated region
        $region29: #{tpu_custom_call.1} parent=11 // pred_check
          %p402 = pneg %p181
        $region30: #{tpu_custom_call.1} parent=11 // pred_check_branch
          %404 = sbr.rel (%p402) target = $region32
        $region31: #{tpu_custom_call.1} parent=11 // pred_region
          _
        $region32: #{tpu_custom_call.1} parent=11 // pred_fallthru
          _
        // Predicated region
        $region33: #{tpu_custom_call.1} parent=11 // pred_check
          %p405 = pneg %p202
        $region34: #{tpu_custom_call.1} parent=11 // pred_check_branch
          %407 = sbr.rel (%p405) target = $region36
        $region35: #{tpu_custom_call.1} parent=11 // pred_region
          _
        $region36: #{tpu_custom_call.1} parent=11 // pred_fallthru
          _
        // Predicated region
        $region37: #{tpu_custom_call.1} parent=11 // pred_check
          %p408 = pneg %p223
        $region38: #{tpu_custom_call.1} parent=11 // pred_check_branch
          %410 = sbr.rel (%p408) target = $region40
        $region39: #{tpu_custom_call.1} parent=11 // pred_region
          _
        $region40: #{tpu_custom_call.1} parent=11 // pred_fallthru
          _
        // Predicated region
        $region41: #{tpu_custom_call.1} parent=11 // pred_check
          %p411 = pneg %p244
        $region42: #{tpu_custom_call.1} parent=11 // pred_check_branch
          %413 = sbr.rel (%p411) target = $region44
        $region43: #{tpu_custom_call.1} parent=11 // pred_region
          _
        $region44: #{tpu_custom_call.1} parent=11 // pred_fallthru
          _
        // Predicated region
        $region45: #{tpu_custom_call.1} parent=11 // pred_check
          %p414 = pneg %p265
        $region46: #{tpu_custom_call.1} parent=11 // pred_check_branch
          %416 = sbr.rel (%p414) target = $region48
        $region47: #{tpu_custom_call.1} parent=11 // pred_region
          _
        $region48: #{tpu_custom_call.1} parent=11 // pred_fallthru
          _
        // Predicated region
        $region49: #{tpu_custom_call.1} parent=11 // pred_check
          %p417 = pneg %p286
        $region50: #{tpu_custom_call.1} parent=11 // pred_check_branch
          %419 = sbr.rel (%p417) target = $region52
        $region51: #{tpu_custom_call.1} parent=11 // pred_region
          _
        $region52: #{tpu_custom_call.1} parent=11 // pred_fallthru
          _
        // Predicated region
        $region53: #{tpu_custom_call.1} parent=11 // pred_check
          %p420 = pneg %p307
        $region54: #{tpu_custom_call.1} parent=11 // pred_check_branch
          %422 = sbr.rel (%p420) target = $region56
        $region55: #{tpu_custom_call.1} parent=11 // pred_region
          _
        $region56: #{tpu_custom_call.1} parent=11 // pred_fallthru
          _
        // Predicated region
        $region57: #{tpu_custom_call.1} parent=11 // pred_check
          %p423 = pneg %p328
        $region58: #{tpu_custom_call.1} parent=11 // pred_check_branch
          %425 = sbr.rel (%p423) target = $region60
        $region59: #{tpu_custom_call.1} parent=11 // pred_region
          _
        $region60: #{tpu_custom_call.1} parent=11 // pred_fallthru
          _
        // Predicated region
        $region61: #{tpu_custom_call.1} parent=11 // pred_check
          %p426 = pneg %p349
        $region62: #{tpu_custom_call.1} parent=11 // pred_check_branch
          %428 = sbr.rel (%p426) target = $region64
        $region63: #{tpu_custom_call.1} parent=11 // pred_region
          _
        $region64: #{tpu_custom_call.1} parent=11 // pred_fallthru
          _
      $region12: #{tpu_custom_call.1} parent=5 // pred_fallthru
        _
      %p429 = scmp.lt.s32.totalorder %s24, 2
      // Predicated region
      $region65: #{tpu_custom_call.1} parent=5 // pred_check
        %p430 = pneg %p429
      $region66: #{tpu_custom_call.1} parent=5 // pred_check_branch
        %432 = sbr.rel (%p430) target = $region68
      $region67: #{tpu_custom_call.1} parent=5 // pred_region
        // Predicated region
        $region69: #{tpu_custom_call.1} parent=67 // pred_check
          %p433 = pneg %p44
        $region70: #{tpu_custom_call.1} parent=67 // pred_check_branch
          %435 = sbr.rel (%p433) target = $region72
        $region71: #{tpu_custom_call.1} parent=67 // pred_region
          %p436 = scmp.lt.s32.totalorder %s24, 1
          %s437 = scalar_select %p436, %s24, 1
          %s438 = smul.addr %s437, 8
          %s439 = scalar_lea.vmem %s0, %s438
        $region72: #{tpu_custom_call.1} parent=67 // pred_fallthru
          _
        // Predicated region
        $region73: #{tpu_custom_call.1} parent=67 // pred_check
          %p440 = pneg %p70
        $region74: #{tpu_custom_call.1} parent=67 // pred_check_branch
          %442 = sbr.rel (%p440) target = $region76
        $region75: #{tpu_custom_call.1} parent=67 // pred_region
          %p443 = scmp.lt.s32.totalorder %s24, 1
          %s444 = scalar_select %p443, %s24, 1
          %s445 = scalar_lea.vmem %s1, %s444
        $region76: #{tpu_custom_call.1} parent=67 // pred_fallthru
          _
      $region68: #{tpu_custom_call.1} parent=5 // pred_fallthru
        _
      %p446 = scmp.le.s32.totalorder 1, %s24
      %p447 = scmp.lt.s32.totalorder %s24, 3
      %p448 = pnand %p446, %p447
      %p449 = pneg %p448
      // Predicated region
      $region77: #{tpu_custom_call.1} parent=5 // pred_check
        _
      $region78: #{tpu_custom_call.1} parent=5 // pred_check_branch
        %451 = sbr.rel (%p448) target = $region80
      $region79: #{tpu_custom_call.1} parent=5 // pred_region
        %s452 = ssub.s32 %s24, 1
        %p453 = scmp.lt.s32.totalorder %s29, 1
        %s454 = scalar_select %p453, %s29, 1
        %s455 = smul.addr %s454, 8
        %s456 = scalar_lea.vmem %s0, %s455
        %p457 = pneg %p50
        %p458 = pneg %p47
        %p459 = scmp.lt.s32.totalorder %s29, 1
        %s460 = scalar_select %p459, %s29, 1
        %s461 = scalar_lea.vmem %s1, %s460
        %p462 = pneg %p76
        %p463 = pneg %p73
        %p464 = pneg %p97
        %p465 = pneg %p94
        %p466 = pneg %p118
        %p467 = pneg %p115
        %p468 = pneg %p139
        %p469 = pneg %p136
        %p470 = pneg %p160
        %p471 = pneg %p157
        %p472 = pneg %p181
        %p473 = pneg %p178
        %p474 = pneg %p202
        %p475 = pneg %p199
        %p476 = pneg %p223
        %p477 = pneg %p220
        %p478 = pneg %p244
        %p479 = pneg %p241
        %p480 = pneg %p265
        %p481 = pneg %p262
        %p482 = pneg %p286
        %p483 = pneg %p283
        %p484 = pneg %p307
        %p485 = pneg %p304
        %p486 = pneg %p328
        %p487 = pneg %p325
        %p488 = pneg %p349
        %p489 = pneg %p346
        %p490 = pneg %p375
        %p491 = pneg %p372
        %s492 = sand.u32 %s362, 1
        %s493 = scalar_lea.sflag [#allocation4], %s492
        %s494 = sand.u32 %s362, 1
        %s495 = smul.addr %s494, 8
        %s496 = scalar_lea.vmem [#allocation3], %s495
        %p497 = scmp.lt.s32.totalorder %s29, 1
        %s498 = scalar_select %p497, %s29, 1
        %s499 = smul.addr %s498, 8
        %s500 = scalar_lea.vmem %s0, %s499
        %p501 = scmp.lt.s32.totalorder %s29, 1
        %s502 = scalar_select %p501, %s29, 1
        %s503 = scalar_lea.vmem %s1, %s502
        %v505 = vld [vmem:[%s500] sm:$0xff]
        %v506 = vld [vmem:[%s503] sm:$0x1]
        %v508 = vlaneseq
        %v509 = vshrl.u32 %v508, 7
        %v510 = vsub.s32 0, %v509
        %v511 = vrot.slane %v506, %v510
        %v513 = vpack.c.bf16 %v505, %v505
        %v514 = vld [vmem:[%s2] sm:$0xf]
        %v515 = vld [vmem:[%s2 + $0x4] sm:$0xf]
        %v516 = vld [vmem:[%s2 + $0x8] sm:$0xf]
        %v517 = vld [vmem:[%s2 + $0xc] sm:$0xf]
        %v522 = vunpack.c.l.b16 %v514
        %v523 = vunpack.c.l.b16 %v515
        %v524 = vunpack.c.l.b16 %v516
        %v525 = vunpack.c.l.b16 %v517
        %v526 = vpack.c.b16 %v523, %v522
        %v527 = vpack.c.b16 %v525, %v524
        %vm530 = vcmask 261120
        %v532 = vsel %vm530, %v513, 0
        %534 = vmatprep.subr.bf16.mxu0 0
        %535 = vmatpush1.bf16.msra.mxu0 %v526
        %536 = vmatprep.subr.bf16.mxu0 0
        %537 = vmatpush1.bf16.msra.mxu0 %v527
        %538 = vmatprep.subr.bf16.mxu0 0
        %539 = vmatpush1.bf16.msra.mxu0 0
        %540 = vmatprep.subr.bf16.mxu0 0
        %541 = vmatpush1.bf16.msra.mxu0 0
        %542 = vmatprep.subr.bf16.mxu0 0
        %543 = vmatpush1.bf16.msra.mxu0 0
        %544 = vmatprep.subr.bf16.mxu0 0
        %545 = vmatpush1.bf16.msra.mxu0 0
        %546 = vmatprep.subr.bf16.mxu0 0
        %547 = vmatpush1.bf16.msra.mxu0 0
        %548 = vmatprep.subr.bf16.mxu0 0
        %549 = vmatpush1.bf16.msra.mxu0 0
        %550 = vmatprep.subr.bf16.mxu0 0
        %551 = vmatpush1.bf16.msra.mxu0 0
        %552 = vmatprep.subr.bf16.mxu0 0
        %553 = vmatpush1.bf16.msra.mxu0 0
        %554 = vmatprep.subr.bf16.mxu0 0
        %555 = vmatpush1.bf16.msra.mxu0 0
        %556 = vmatprep.subr.bf16.mxu0 0
        %557 = vmatpush1.bf16.msra.mxu0 0
        %558 = vmatprep.subr.bf16.mxu0 0
        %559 = vmatpush1.bf16.msra.mxu0 0
        %560 = vmatprep.subr.bf16.mxu0 0
        %561 = vmatpush1.bf16.msra.mxu0 0
        %562 = vmatprep.subr.bf16.mxu0 0
        %563 = vmatpush1.bf16.msra.mxu0 0
        %564 = vmatprep.subr.bf16.mxu0 0
        %565 = vmatpush1.bf16.msra.mxu0 0
        %566 = vmatprep.mubr.bf16.mxu0 0
        %567 = vmatmul.mubr.bf16.gmra.mrb[0].mxu0 %v532
        %v568 = vpop.f32.mrb[0].mxu0
        %v569 = vadd.f32 0.0, %v568
        %v570 = vpop.f32.mrb[0].mxu0
        %v571 = vpop.f32.mrb[0].mxu0
        %v572 = vpop.f32.mrb[0].mxu0
        %573 = vdwg.mxu0
        %v574 = vld [vmem:[%s3] sm:$0xf]
        %v575 = vld [vmem:[%s3 + $0x4] sm:$0xf]
        %v576 = vld [vmem:[%s3 + $0x8] sm:$0xf]
        %v577 = vld [vmem:[%s3 + $0xc] sm:$0xf]
        %v582 = vunpack.c.l.b16 %v574
        %v583 = vunpack.c.l.b16 %v575
        %v584 = vunpack.c.l.b16 %v576
        %v585 = vunpack.c.l.b16 %v577
        %v586 = vpack.c.b16 %v583, %v582
        %v587 = vpack.c.b16 %v585, %v584
        %590 = vmatprep.subr.bf16.mxu0 0
        %591 = vmatpush1.bf16.msra.mxu0 %v586
        %592 = vmatprep.subr.bf16.mxu0 0
        %593 = vmatpush1.bf16.msra.mxu0 %v587
        %594 = vmatprep.subr.bf16.mxu0 0
        %595 = vmatpush1.bf16.msra.mxu0 0
        %596 = vmatprep.subr.bf16.mxu0 0
        %597 = vmatpush1.bf16.msra.mxu0 0
        %598 = vmatprep.subr.bf16.mxu0 0
        %599 = vmatpush1.bf16.msra.mxu0 0
        %600 = vmatprep.subr.bf16.mxu0 0
        %601 = vmatpush1.bf16.msra.mxu0 0
        %602 = vmatprep.subr.bf16.mxu0 0
        %603 = vmatpush1.bf16.msra.mxu0 0
        %604 = vmatprep.subr.bf16.mxu0 0
        %605 = vmatpush1.bf16.msra.mxu0 0
        %606 = vmatprep.subr.bf16.mxu0 0
        %607 = vmatpush1.bf16.msra.mxu0 0
        %608 = vmatprep.subr.bf16.mxu0 0
        %609 = vmatpush1.bf16.msra.mxu0 0
        %610 = vmatprep.subr.bf16.mxu0 0
        %611 = vmatpush1.bf16.msra.mxu0 0
        %612 = vmatprep.subr.bf16.mxu0 0
        %613 = vmatpush1.bf16.msra.mxu0 0
        %614 = vmatprep.subr.bf16.mxu0 0
        %615 = vmatpush1.bf16.msra.mxu0 0
        %616 = vmatprep.subr.bf16.mxu0 0
        %617 = vmatpush1.bf16.msra.mxu0 0
        %618 = vmatprep.subr.bf16.mxu0 0
        %619 = vmatpush1.bf16.msra.mxu0 0
        %620 = vmatprep.subr.bf16.mxu0 0
        %621 = vmatpush1.bf16.msra.mxu0 0
        %622 = vmatprep.mubr.bf16.mxu0 0
        %623 = vmatmul.mubr.bf16.gmra.mrb[0].mxu0 %v532
        %v624 = vpop.f32.mrb[0].mxu0
        %v625 = vadd.f32 0.0, %v624
        %v626 = vpop.f32.mrb[0].mxu0
        %v627 = vpop.f32.mrb[0].mxu0
        %v628 = vpop.f32.mrb[0].mxu0
        %629 = vdwg.mxu0
        %v630 = vld [vmem:[%s4] sm:$0xf]
        %v631 = vld [vmem:[%s4 + $0x4] sm:$0xf]
        %v632 = vld [vmem:[%s4 + $0x8] sm:$0xf]
        %v633 = vld [vmem:[%s4 + $0xc] sm:$0xf]
        %v638 = vunpack.c.l.b16 %v630
        %v639 = vunpack.c.l.b16 %v631
        %v640 = vunpack.c.l.b16 %v632
        %v641 = vunpack.c.l.b16 %v633
        %v642 = vpack.c.b16 %v639, %v638
        %v643 = vpack.c.b16 %v641, %v640
        %646 = vmatprep.subr.bf16.mxu0 0
        %647 = vmatpush1.bf16.msra.mxu0 %v642
        %648 = vmatprep.subr.bf16.mxu0 0
        %649 = vmatpush1.bf16.msra.mxu0 %v643
        %650 = vmatprep.subr.bf16.mxu0 0
        %651 = vmatpush1.bf16.msra.mxu0 0
        %652 = vmatprep.subr.bf16.mxu0 0
        %653 = vmatpush1.bf16.msra.mxu0 0
        %654 = vmatprep.subr.bf16.mxu0 0
        %655 = vmatpush1.bf16.msra.mxu0 0
        %656 = vmatprep.subr.bf16.mxu0 0
        %657 = vmatpush1.bf16.msra.mxu0 0
        %658 = vmatprep.subr.bf16.mxu0 0
        %659 = vmatpush1.bf16.msra.mxu0 0
        %660 = vmatprep.subr.bf16.mxu0 0
        %661 = vmatpush1.bf16.msra.mxu0 0
        %662 = vmatprep.subr.bf16.mxu0 0
        %663 = vmatpush1.bf16.msra.mxu0 0
        %664 = vmatprep.subr.bf16.mxu0 0
        %665 = vmatpush1.bf16.msra.mxu0 0
        %666 = vmatprep.subr.bf16.mxu0 0
        %667 = vmatpush1.bf16.msra.mxu0 0
        %668 = vmatprep.subr.bf16.mxu0 0
        %669 = vmatpush1.bf16.msra.mxu0 0
        %670 = vmatprep.subr.bf16.mxu0 0
        %671 = vmatpush1.bf16.msra.mxu0 0
        %672 = vmatprep.subr.bf16.mxu0 0
        %673 = vmatpush1.bf16.msra.mxu0 0
        %674 = vmatprep.subr.bf16.mxu0 0
        %675 = vmatpush1.bf16.msra.mxu0 0
        %676 = vmatprep.subr.bf16.mxu0 0
        %677 = vmatpush1.bf16.msra.mxu0 0
        %678 = vmatprep.mubr.bf16.mxu0 0
        %679 = vmatmul.mubr.bf16.gmra.mrb[0].mxu0 %v532
        %v680 = vpop.f32.mrb[0].mxu0
        %v681 = vadd.f32 0.0, %v680
        %v682 = vpop.f32.mrb[0].mxu0
        %v683 = vpop.f32.mrb[0].mxu0
        %v684 = vpop.f32.mrb[0].mxu0
        %685 = vdwg.mxu0
        %v686 = vpack.c.bf16 %v569, %v569
        %v687 = vpack.c.bf16 %v625, %v625
        %vm688 = vcmask 64512
        %v690 = vsel %vm688, %v686, 0
        %v693 = vsel %vm688, %v687, 0
        %695 = vmatprep.subr.bf16.mxu0 0
        %696 = vmatpush1.bf16.xpose.msra.mxu0 %v693
        %697 = vmatprep.subr.bf16.mxu0 0
        %698 = vmatpush1.bf16.xpose.msra.mxu0 0
        %699 = vmatprep.subr.bf16.mxu0 0
        %700 = vmatpush1.bf16.xpose.msra.mxu0 0
        %701 = vmatprep.subr.bf16.mxu0 0
        %702 = vmatpush1.bf16.xpose.msra.mxu0 0
        %703 = vmatprep.subr.bf16.mxu0 0
        %704 = vmatpush1.bf16.xpose.msra.mxu0 0
        %705 = vmatprep.subr.bf16.mxu0 0
        %706 = vmatpush1.bf16.xpose.msra.mxu0 0
        %707 = vmatprep.subr.bf16.mxu0 0
        %708 = vmatpush1.bf16.xpose.msra.mxu0 0
        %709 = vmatprep.subr.bf16.mxu0 0
        %710 = vmatpush1.bf16.xpose.msra.mxu0 0
        %711 = vmatprep.subr.bf16.mxu0 0
        %712 = vmatpush1.bf16.xpose.msra.mxu0 0
        %713 = vmatprep.subr.bf16.mxu0 0
        %714 = vmatpush1.bf16.xpose.msra.mxu0 0
        %715 = vmatprep.subr.bf16.mxu0 0
        %716 = vmatpush1.bf16.xpose.msra.mxu0 0
        %717 = vmatprep.subr.bf16.mxu0 0
        %718 = vmatpush1.bf16.xpose.msra.mxu0 0
        %719 = vmatprep.subr.bf16.mxu0 0
        %720 = vmatpush1.bf16.xpose.msra.mxu0 0
        %721 = vmatprep.subr.bf16.mxu0 0
        %722 = vmatpush1.bf16.xpose.msra.mxu0 0
        %723 = vmatprep.subr.bf16.mxu0 0
        %724 = vmatpush1.bf16.xpose.msra.mxu0 0
        %725 = vmatprep.subr.bf16.mxu0 0
        %726 = vmatpush1.bf16.xpose.msra.mxu0 0
        %727 = vmatprep.mubr.bf16.mxu0 0
        %728 = vmatmul.mubr.bf16.gmra.mrb[0].mxu0 %v690
        %v729 = vpop.f32.mrb[0].mxu0
        %v730 = vadd.f32 0.0, %v729
        %v731 = vpop.f32.mrb[0].mxu0
        %v732 = vpop.f32.mrb[0].mxu0
        %v733 = vpop.f32.mrb[0].mxu0
        %734 = vdwg.mxu0
        %v735 = vmul.f32 %v730, 0.35355338
        %v736 = vadd.f32 %v735, %v511
        %v737 = vsel %vm688, %v736, -inf
        %738 = vmax.xlane.f32.xlu0 %v737
        %v739 = vpop.xlane.xlu0 %738
        %v740 = vsub.f32 %v736, %v739
        %v741 = vmul.f32 %v740, 1.442695
        %v742 = vpow.pop %v741
        %v743 = vsel %vm688, %v742, 0.0
        %744 = vadd.xlane.f32.xlu0 %v743
        %v745 = vpop.xlane.xlu0 %744
        %v746 = vrcp.pop %v745
        %v747 = vmul.f32 %v742, %v746
        %v748 = vpack.c.bf16 %v747, %v747
        %v749 = vpack.c.bf16 %v681, %v681
        %v751 = vsel %vm688, %v748, 0
        %vm753 = vcmask 1043456
        %v755 = vsel %vm753, %v749, 0
        %757 = vmatprep.subr.bf16.mxu0 0
        %758 = vmatpush1.bf16.msra.mxu0 %v755
        %759 = vmatprep.subr.bf16.mxu0 0
        %760 = vmatpush1.bf16.msra.mxu0 0
        %761 = vmatprep.subr.bf16.mxu0 0
        %762 = vmatpush1.bf16.msra.mxu0 0
        %763 = vmatprep.subr.bf16.mxu0 0
        %764 = vmatpush1.bf16.msra.mxu0 0
        %765 = vmatprep.subr.bf16.mxu0 0
        %766 = vmatpush1.bf16.msra.mxu0 0
        %767 = vmatprep.subr.bf16.mxu0 0
        %768 = vmatpush1.bf16.msra.mxu0 0
        %769 = vmatprep.subr.bf16.mxu0 0
        %770 = vmatpush1.bf16.msra.mxu0 0
        %771 = vmatprep.subr.bf16.mxu0 0
        %772 = vmatpush1.bf16.msra.mxu0 0
        %773 = vmatprep.subr.bf16.mxu0 0
        %774 = vmatpush1.bf16.msra.mxu0 0
        %775 = vmatprep.subr.bf16.mxu0 0
        %776 = vmatpush1.bf16.msra.mxu0 0
        %777 = vmatprep.subr.bf16.mxu0 0
        %778 = vmatpush1.bf16.msra.mxu0 0
        %779 = vmatprep.subr.bf16.mxu0 0
        %780 = vmatpush1.bf16.msra.mxu0 0
        %781 = vmatprep.subr.bf16.mxu0 0
        %782 = vmatpush1.bf16.msra.mxu0 0
        %783 = vmatprep.subr.bf16.mxu0 0
        %784 = vmatpush1.bf16.msra.mxu0 0
        %785 = vmatprep.subr.bf16.mxu0 0
        %786 = vmatpush1.bf16.msra.mxu0 0
        %787 = vmatprep.subr.bf16.mxu0 0
        %788 = vmatpush1.bf16.msra.mxu0 0
        %789 = vmatprep.mubr.bf16.mxu0 0
        %790 = vmatmul.mubr.bf16.gmra.mrb[0].mxu0 %v751
        %v791 = vpop.f32.mrb[0].mxu0
        %v792 = vadd.f32 0.0, %v791
        %v793 = vpop.f32.mrb[0].mxu0
        %v794 = vpop.f32.mrb[0].mxu0
        %v795 = vpop.f32.mrb[0].mxu0
        %796 = vdwg.mxu0
        %797 = vst.msk [vmem:[#allocation2] sm:$0xff] %vm688, %v792
        %s798 = scalar_lea.vmem %s2, 16
        %v799 = vld [vmem:[%s798] sm:$0xf]
        %v800 = vld [vmem:[%s798 + $0x4] sm:$0xf]
        %v801 = vld [vmem:[%s798 + $0x8] sm:$0xf]
        %v802 = vld [vmem:[%s798 + $0xc] sm:$0xf]
        %v807 = vunpack.c.l.b16 %v799
        %v808 = vunpack.c.l.b16 %v800
        %v809 = vunpack.c.l.b16 %v801
        %v810 = vunpack.c.l.b16 %v802
        %v811 = vpack.c.b16 %v808, %v807
        %v812 = vpack.c.b16 %v810, %v809
        %815 = vmatprep.subr.bf16.mxu0 0
        %816 = vmatpush1.bf16.msra.mxu0 %v811
        %817 = vmatprep.subr.bf16.mxu0 0
        %818 = vmatpush1.bf16.msra.mxu0 %v812
        %819 = vmatprep.subr.bf16.mxu0 0
        %820 = vmatpush1.bf16.msra.mxu0 0
        %821 = vmatprep.subr.bf16.mxu0 0
        %822 = vmatpush1.bf16.msra.mxu0 0
        %823 = vmatprep.subr.bf16.mxu0 0
        %824 = vmatpush1.bf16.msra.mxu0 0
        %825 = vmatprep.subr.bf16.mxu0 0
        %826 = vmatpush1.bf16.msra.mxu0 0
        %827 = vmatprep.subr.bf16.mxu0 0
        %828 = vmatpush1.bf16.msra.mxu0 0
        %829 = vmatprep.subr.bf16.mxu0 0
        %830 = vmatpush1.bf16.msra.mxu0 0
        %831 = vmatprep.subr.bf16.mxu0 0
        %832 = vmatpush1.bf16.msra.mxu0 0
        %833 = vmatprep.subr.bf16.mxu0 0
        %834 = vmatpush1.bf16.msra.mxu0 0
        %835 = vmatprep.subr.bf16.mxu0 0
        %836 = vmatpush1.bf16.msra.mxu0 0
        %837 = vmatprep.subr.bf16.mxu0 0
        %838 = vmatpush1.bf16.msra.mxu0 0
        %839 = vmatprep.subr.bf16.mxu0 0
        %840 = vmatpush1.bf16.msra.mxu0 0
        %841 = vmatprep.subr.bf16.mxu0 0
        %842 = vmatpush1.bf16.msra.mxu0 0
        %843 = vmatprep.subr.bf16.mxu0 0
        %844 = vmatpush1.bf16.msra.mxu0 0
        %845 = vmatprep.subr.bf16.mxu0 0
        %846 = vmatpush1.bf16.msra.mxu0 0
        %847 = vmatprep.mubr.bf16.mxu0 0
        %848 = vmatmul.mubr.bf16.gmra.mrb[0].mxu0 %v532
        %v849 = vpop.f32.mrb[0].mxu0
        %v850 = vadd.f32 0.0, %v849
        %v851 = vpop.f32.mrb[0].mxu0
        %v852 = vpop.f32.mrb[0].mxu0
        %v853 = vpop.f32.mrb[0].mxu0
        %854 = vdwg.mxu0
        %s855 = scalar_lea.vmem %s3, 16
        %v856 = vld [vmem:[%s855] sm:$0xf]
        %v857 = vld [vmem:[%s855 + $0x4] sm:$0xf]
        %v858 = vld [vmem:[%s855 + $0x8] sm:$0xf]
        %v859 = vld [vmem:[%s855 + $0xc] sm:$0xf]
        %v864 = vunpack.c.l.b16 %v856
        %v865 = vunpack.c.l.b16 %v857
        %v866 = vunpack.c.l.b16 %v858
        %v867 = vunpack.c.l.b16 %v859
        %v868 = vpack.c.b16 %v865, %v864
        %v869 = vpack.c.b16 %v867, %v866
        %872 = vmatprep.subr.bf16.mxu0 0
        %873 = vmatpush1.bf16.msra.mxu0 %v868
        %874 = vmatprep.subr.bf16.mxu0 0
        %875 = vmatpush1.bf16.msra.mxu0 %v869
        %876 = vmatprep.subr.bf16.mxu0 0
        %877 = vmatpush1.bf16.msra.mxu0 0
        %878 = vmatprep.subr.bf16.mxu0 0
        %879 = vmatpush1.bf16.msra.mxu0 0
        %880 = vmatprep.subr.bf16.mxu0 0
        %881 = vmatpush1.bf16.msra.mxu0 0
        %882 = vmatprep.subr.bf16.mxu0 0
        %883 = vmatpush1.bf16.msra.mxu0 0
        %884 = vmatprep.subr.bf16.mxu0 0
        %885 = vmatpush1.bf16.msra.mxu0 0
        %886 = vmatprep.subr.bf16.mxu0 0
        %887 = vmatpush1.bf16.msra.mxu0 0
        %888 = vmatprep.subr.bf16.mxu0 0
        %889 = vmatpush1.bf16.msra.mxu0 0
        %890 = vmatprep.subr.bf16.mxu0 0
        %891 = vmatpush1.bf16.msra.mxu0 0
        %892 = vmatprep.subr.bf16.mxu0 0
        %893 = vmatpush1.bf16.msra.mxu0 0
        %894 = vmatprep.subr.bf16.mxu0 0
        %895 = vmatpush1.bf16.msra.mxu0 0
        %896 = vmatprep.subr.bf16.mxu0 0
        %897 = vmatpush1.bf16.msra.mxu0 0
        %898 = vmatprep.subr.bf16.mxu0 0
        %899 = vmatpush1.bf16.msra.mxu0 0
        %900 = vmatprep.subr.bf16.mxu0 0
        %901 = vmatpush1.bf16.msra.mxu0 0
        %902 = vmatprep.subr.bf16.mxu0 0
        %903 = vmatpush1.bf16.msra.mxu0 0
        %904 = vmatprep.mubr.bf16.mxu0 0
        %905 = vmatmul.mubr.bf16.gmra.mrb[0].mxu0 %v532
        %v906 = vpop.f32.mrb[0].mxu0
        %v907 = vadd.f32 0.0, %v906
        %v908 = vpop.f32.mrb[0].mxu0
        %v909 = vpop.f32.mrb[0].mxu0
        %v910 = vpop.f32.mrb[0].mxu0
        %911 = vdwg.mxu0
        %s912 = scalar_lea.vmem %s4, 16
        %v913 = vld [vmem:[%s912] sm:$0xf]
        %v914 = vld [vmem:[%s912 + $0x4] sm:$0xf]
        %v915 = vld [vmem:[%s912 + $0x8] sm:$0xf]
        %v916 = vld [vmem:[%s912 + $0xc] sm:$0xf]
        %v921 = vunpack.c.l.b16 %v913
        %v922 = vunpack.c.l.b16 %v914
        %v923 = vunpack.c.l.b16 %v915
        %v924 = vunpack.c.l.b16 %v916
        %v925 = vpack.c.b16 %v922, %v921
        %v926 = vpack.c.b16 %v924, %v923
        %929 = vmatprep.subr.bf16.mxu0 0
        %930 = vmatpush1.bf16.msra.mxu0 %v925
        %931 = vmatprep.subr.bf16.mxu0 0
        %932 = vmatpush1.bf16.msra.mxu0 %v926
        %933 = vmatprep.subr.bf16.mxu0 0
        %934 = vmatpush1.bf16.msra.mxu0 0
        %935 = vmatprep.subr.bf16.mxu0 0
        %936 = vmatpush1.bf16.msra.mxu0 0
        %937 = vmatprep.subr.bf16.mxu0 0
        %938 = vmatpush1.bf16.msra.mxu0 0
        %939 = vmatprep.subr.bf16.mxu0 0
        %940 = vmatpush1.bf16.msra.mxu0 0
        %941 = vmatprep.subr.bf16.mxu0 0
        %942 = vmatpush1.bf16.msra.mxu0 0
        %943 = vmatprep.subr.bf16.mxu0 0
        %944 = vmatpush1.bf16.msra.mxu0 0
        %945 = vmatprep.subr.bf16.mxu0 0
        %946 = vmatpush1.bf16.msra.mxu0 0
        %947 = vmatprep.subr.bf16.mxu0 0
        %948 = vmatpush1.bf16.msra.mxu0 0
        %949 = vmatprep.subr.bf16.mxu0 0
        %950 = vmatpush1.bf16.msra.mxu0 0
        %951 = vmatprep.subr.bf16.mxu0 0
        %952 = vmatpush1.bf16.msra.mxu0 0
        %953 = vmatprep.subr.bf16.mxu0 0
        %954 = vmatpush1.bf16.msra.mxu0 0
        %955 = vmatprep.subr.bf16.mxu0 0
        %956 = vmatpush1.bf16.msra.mxu0 0
        %957 = vmatprep.subr.bf16.mxu0 0
        %958 = vmatpush1.bf16.msra.mxu0 0
        %959 = vmatprep.subr.bf16.mxu0 0
        %960 = vmatpush1.bf16.msra.mxu0 0
        %961 = vmatprep.mubr.bf16.mxu0 0
        %962 = vmatmul.mubr.bf16.gmra.mrb[0].mxu0 %v532
        %v963 = vpop.f32.mrb[0].mxu0
        %v964 = vadd.f32 0.0, %v963
        %v965 = vpop.f32.mrb[0].mxu0
        %v966 = vpop.f32.mrb[0].mxu0
        %v967 = vpop.f32.mrb[0].mxu0
        %968 = vdwg.mxu0
        %v969 = vpack.c.bf16 %v850, %v850
        %v970 = vpack.c.bf16 %v907, %v907
        %v972 = vsel %vm688, %v969, 0
        %v975 = vsel %vm688, %v970, 0
        %977 = vmatprep.subr.bf16.mxu0 0
        %978 = vmatpush1.bf16.xpose.msra.mxu0 %v975
        %979 = vmatprep.subr.bf16.mxu0 0
        %980 = vmatpush1.bf16.xpose.msra.mxu0 0
        %981 = vmatprep.subr.bf16.mxu0 0
        %982 = vmatpush1.bf16.xpose.msra.mxu0 0
        %983 = vmatprep.subr.bf16.mxu0 0
        %984 = vmatpush1.bf16.xpose.msra.mxu0 0
        %985 = vmatprep.subr.bf16.mxu0 0
        %986 = vmatpush1.bf16.xpose.msra.mxu0 0
        %987 = vmatprep.subr.bf16.mxu0 0
        %988 = vmatpush1.bf16.xpose.msra.mxu0 0
        %989 = vmatprep.subr.bf16.mxu0 0
        %990 = vmatpush1.bf16.xpose.msra.mxu0 0
        %991 = vmatprep.subr.bf16.mxu0 0
        %992 = vmatpush1.bf16.xpose.msra.mxu0 0
        %993 = vmatprep.subr.bf16.mxu0 0
        %994 = vmatpush1.bf16.xpose.msra.mxu0 0
        %995 = vmatprep.subr.bf16.mxu0 0
        %996 = vmatpush1.bf16.xpose.msra.mxu0 0
        %997 = vmatprep.subr.bf16.mxu0 0
        %998 = vmatpush1.bf16.xpose.msra.mxu0 0
        %999 = vmatprep.subr.bf16.mxu0 0
        %1000 = vmatpush1.bf16.xpose.msra.mxu0 0
        %1001 = vmatprep.subr.bf16.mxu0 0
        %1002 = vmatpush1.bf16.xpose.msra.mxu0 0
        %1003 = vmatprep.subr.bf16.mxu0 0
        %1004 = vmatpush1.bf16.xpose.msra.mxu0 0
        %1005 = vmatprep.subr.bf16.mxu0 0
        %1006 = vmatpush1.bf16.xpose.msra.mxu0 0
        %1007 = vmatprep.subr.bf16.mxu0 0
        %1008 = vmatpush1.bf16.xpose.msra.mxu0 0
        %1009 = vmatprep.mubr.bf16.mxu0 0
        %1010 = vmatmul.mubr.bf16.gmra.mrb[0].mxu0 %v972
        %v1011 = vpop.f32.mrb[0].mxu0
        %v1012 = vadd.f32 0.0, %v1011
        %v1013 = vpop.f32.mrb[0].mxu0
        %v1014 = vpop.f32.mrb[0].mxu0
        %v1015 = vpop.f32.mrb[0].mxu0
        %1016 = vdwg.mxu0
        %v1017 = vmul.f32 %v1012, 0.35355338
        %v1018 = vadd.f32 %v1017, %v511
        %v1019 = vsel %vm688, %v1018, -inf
        %1020 = vmax.xlane.f32.xlu0 %v1019
        %v1021 = vpop.xlane.xlu0 %1020
        %v1022 = vsub.f32 %v1018, %v1021
        %v1023 = vmul.f32 %v1022, 1.442695
        %v1024 = vpow.pop %v1023
        %v1025 = vsel %vm688, %v1024, 0.0
        %1026 = vadd.xlane.f32.xlu0 %v1025
        %v1027 = vpop.xlane.xlu0 %1026
        %v1028 = vrcp.pop %v1027
        %v1029 = vmul.f32 %v1024, %v1028
        %v1030 = vpack.c.bf16 %v1029, %v1029
        %v1031 = vpack.c.bf16 %v964, %v964
        %v1033 = vsel %vm688, %v1030, 0
        %v1036 = vsel %vm753, %v1031, 0
        %1038 = vmatprep.subr.bf16.mxu0 0
        %1039 = vmatpush1.bf16.msra.mxu0 %v1036
        %1040 = vmatprep.subr.bf16.mxu0 0
        %1041 = vmatpush1.bf16.msra.mxu0 0
        %1042 = vmatprep.subr.bf16.mxu0 0
        %1043 = vmatpush1.bf16.msra.mxu0 0
        %1044 = vmatprep.subr.bf16.mxu0 0
        %1045 = vmatpush1.bf16.msra.mxu0 0
        %1046 = vmatprep.subr.bf16.mxu0 0
        %1047 = vmatpush1.bf16.msra.mxu0 0
        %1048 = vmatprep.subr.bf16.mxu0 0
        %1049 = vmatpush1.bf16.msra.mxu0 0
        %1050 = vmatprep.subr.bf16.mxu0 0
        %1051 = vmatpush1.bf16.msra.mxu0 0
        %1052 = vmatprep.subr.bf16.mxu0 0
        %1053 = vmatpush1.bf16.msra.mxu0 0
        %1054 = vmatprep.subr.bf16.mxu0 0
        %1055 = vmatpush1.bf16.msra.mxu0 0
        %1056 = vmatprep.subr.bf16.mxu0 0
        %1057 = vmatpush1.bf16.msra.mxu0 0
        %1058 = vmatprep.subr.bf16.mxu0 0
        %1059 = vmatpush1.bf16.msra.mxu0 0
        %1060 = vmatprep.subr.bf16.mxu0 0
        %1061 = vmatpush1.bf16.msra.mxu0 0
        %1062 = vmatprep.subr.bf16.mxu0 0
        %1063 = vmatpush1.bf16.msra.mxu0 0
        %1064 = vmatprep.subr.bf16.mxu0 0
        %1065 = vmatpush1.bf16.msra.mxu0 0
        %1066 = vmatprep.subr.bf16.mxu0 0
        %1067 = vmatpush1.bf16.msra.mxu0 0
        %1068 = vmatprep.subr.bf16.mxu0 0
        %1069 = vmatpush1.bf16.msra.mxu0 0
        %1070 = vmatprep.mubr.bf16.mxu0 0
        %1071 = vmatmul.mubr.bf16.gmra.mrb[0].mxu0 %v1033
        %v1072 = vpop.f32.mrb[0].mxu0
        %v1073 = vadd.f32 0.0, %v1072
        %v1074 = vpop.f32.mrb[0].mxu0
        %v1075 = vpop.f32.mrb[0].mxu0
        %v1076 = vpop.f32.mrb[0].mxu0
        %1077 = vdwg.mxu0
        %1079 = vrot.lane.b32.xlu0 %v1073, 8
        %v1080 = vpop.permute.xlu0 %1079
        %vm1082 = vcmask 130112
        %1083 = vst.msk [vmem:[#allocation2] sm:$0xff] %vm1082, %v1080
        %s1084 = scalar_lea.vmem %s2, 32
        %v1085 = vld [vmem:[%s1084] sm:$0xf]
        %v1086 = vld [vmem:[%s1084 + $0x4] sm:$0xf]
        %v1087 = vld [vmem:[%s1084 + $0x8] sm:$0xf]
        %v1088 = vld [vmem:[%s1084 + $0xc] sm:$0xf]
        %v1093 = vunpack.c.l.b16 %v1085
        %v1094 = vunpack.c.l.b16 %v1086
        %v1095 = vunpack.c.l.b16 %v1087
        %v1096 = vunpack.c.l.b16 %v1088
        %v1097 = vpack.c.b16 %v1094, %v1093
        %v1098 = vpack.c.b16 %v1096, %v1095
        %1101 = vmatprep.subr.bf16.mxu0 0
        %1102 = vmatpush1.bf16.msra.mxu0 %v1097
        %1103 = vmatprep.subr.bf16.mxu0 0
        %1104 = vmatpush1.bf16.msra.mxu0 %v1098
        %1105 = vmatprep.subr.bf16.mxu0 0
        %1106 = vmatpush1.bf16.msra.mxu0 0
        %1107 = vmatprep.subr.bf16.mxu0 0
        %1108 = vmatpush1.bf16.msra.mxu0 0
        %1109 = vmatprep.subr.bf16.mxu0 0
        %1110 = vmatpush1.bf16.msra.mxu0 0
        %1111 = vmatprep.subr.bf16.mxu0 0
        %1112 = vmatpush1.bf16.msra.mxu0 0
        %1113 = vmatprep.subr.bf16.mxu0 0
        %1114 = vmatpush1.bf16.msra.mxu0 0
        %1115 = vmatprep.subr.bf16.mxu0 0
        %1116 = vmatpush1.bf16.msra.mxu0 0
        %1117 = vmatprep.subr.bf16.mxu0 0
        %1118 = vmatpush1.bf16.msra.mxu0 0
        %1119 = vmatprep.subr.bf16.mxu0 0
        %1120 = vmatpush1.bf16.msra.mxu0 0
        %1121 = vmatprep.subr.bf16.mxu0 0
        %1122 = vmatpush1.bf16.msra.mxu0 0
        %1123 = vmatprep.subr.bf16.mxu0 0
        %1124 = vmatpush1.bf16.msra.mxu0 0
        %1125 = vmatprep.subr.bf16.mxu0 0
        %1126 = vmatpush1.bf16.msra.mxu0 0
        %1127 = vmatprep.subr.bf16.mxu0 0
        %1128 = vmatpush1.bf16.msra.mxu0 0
        %1129 = vmatprep.subr.bf16.mxu0 0
        %1130 = vmatpush1.bf16.msra.mxu0 0
        %1131 = vmatprep.subr.bf16.mxu0 0
        %1132 = vmatpush1.bf16.msra.mxu0 0
        %1133 = vmatprep.mubr.bf16.mxu0 0
        %1134 = vmatmul.mubr.bf16.gmra.mrb[0].mxu0 %v532
        %v1135 = vpop.f32.mrb[0].mxu0
        %v1136 = vadd.f32 0.0, %v1135
        %v1137 = vpop.f32.mrb[0].mxu0
        %v1138 = vpop.f32.mrb[0].mxu0
        %v1139 = vpop.f32.mrb[0].mxu0
        %1140 = vdwg.mxu0
        %s1141 = scalar_lea.vmem %s3, 32
        %v1142 = vld [vmem:[%s1141] sm:$0xf]
        %v1143 = vld [vmem:[%s1141 + $0x4] sm:$0xf]
        %v1144 = vld [vmem:[%s1141 + $0x8] sm:$0xf]
        %v1145 = vld [vmem:[%s1141 + $0xc] sm:$0xf]
        %v1150 = vunpack.c.l.b16 %v1142
        %v1151 = vunpack.c.l.b16 %v1143
        %v1152 = vunpack.c.l.b16 %v1144
        %v1153 = vunpack.c.l.b16 %v1145
        %v1154 = vpack.c.b16 %v1151, %v1150
        %v1155 = vpack.c.b16 %v1153, %v1152
        %1158 = vmatprep.subr.bf16.mxu0 0
        %1159 = vmatpush1.bf16.msra.mxu0 %v1154
        %1160 = vmatprep.subr.bf16.mxu0 0
        %1161 = vmatpush1.bf16.msra.mxu0 %v1155
        %1162 = vmatprep.subr.bf16.mxu0 0
        %1163 = vmatpush1.bf16.msra.mxu0 0
        %1164 = vmatprep.subr.bf16.mxu0 0
        %1165 = vmatpush1.bf16.msra.mxu0 0
        %1166 = vmatprep.subr.bf16.mxu0 0
        %1167 = vmatpush1.bf16.msra.mxu0 0
        %1168 = vmatprep.subr.bf16.mxu0 0
        %1169 = vmatpush1.bf16.msra.mxu0 0
        %1170 = vmatprep.subr.bf16.mxu0 0
        %1171 = vmatpush1.bf16.msra.mxu0 0
        %1172 = vmatprep.subr.bf16.mxu0 0
        %1173 = vmatpush1.bf16.msra.mxu0 0
        %1174 = vmatprep.subr.bf16.mxu0 0
        %1175 = vmatpush1.bf16.msra.mxu0 0
        %1176 = vmatprep.subr.bf16.mxu0 0
        %1177 = vmatpush1.bf16.msra.mxu0 0
        %1178 = vmatprep.subr.bf16.mxu0 0
        %1179 = vmatpush1.bf16.msra.mxu0 0
        %1180 = vmatprep.subr.bf16.mxu0 0
        %1181 = vmatpush1.bf16.msra.mxu0 0
        %1182 = vmatprep.subr.bf16.mxu0 0
        %1183 = vmatpush1.bf16.msra.mxu0 0
        %1184 = vmatprep.subr.bf16.mxu0 0
        %1185 = vmatpush1.bf16.msra.mxu0 0
        %1186 = vmatprep.subr.bf16.mxu0 0
        %1187 = vmatpush1.bf16.msra.mxu0 0
        %1188 = vmatprep.subr.bf16.mxu0 0
        %1189 = vmatpush1.bf16.msra.mxu0 0
        %1190 = vmatprep.mubr.bf16.mxu0 0
        %1191 = vmatmul.mubr.bf16.gmra.mrb[0].mxu0 %v532
        %v1192 = vpop.f32.mrb[0].mxu0
        %v1193 = vadd.f32 0.0, %v1192
        %v1194 = vpop.f32.mrb[0].mxu0
        %v1195 = vpop.f32.mrb[0].mxu0
        %v1196 = vpop.f32.mrb[0].mxu0
        %1197 = vdwg.mxu0
        %s1198 = scalar_lea.vmem %s4, 32
        %v1199 = vld [vmem:[%s1198] sm:$0xf]
        %v1200 = vld [vmem:[%s1198 + $0x4] sm:$0xf]
        %v1201 = vld [vmem:[%s1198 + $0x8] sm:$0xf]
        %v1202 = vld [vmem:[%s1198 + $0xc] sm:$0xf]
        %v1207 = vunpack.c.l.b16 %v1199
        %v1208 = vunpack.c.l.b16 %v1200
        %v1209 = vunpack.c.l.b16 %v1201
        %v1210 = vunpack.c.l.b16 %v1202
        %v1211 = vpack.c.b16 %v1208, %v1207
        %v1212 = vpack.c.b16 %v1210, %v1209
        %1215 = vmatprep.subr.bf16.mxu0 0
        %1216 = vmatpush1.bf16.msra.mxu0 %v1211
        %1217 = vmatprep.subr.bf16.mxu0 0
        %1218 = vmatpush1.bf16.msra.mxu0 %v1212
        %1219 = vmatprep.subr.bf16.mxu0 0
        %1220 = vmatpush1.bf16.msra.mxu0 0
        %1221 = vmatprep.subr.bf16.mxu0 0
        %1222 = vmatpush1.bf16.msra.mxu0 0
        %1223 = vmatprep.subr.bf16.mxu0 0
        %1224 = vmatpush1.bf16.msra.mxu0 0
        %1225 = vmatprep.subr.bf16.mxu0 0
        %1226 = vmatpush1.bf16.msra.mxu0 0
        %1227 = vmatprep.subr.bf16.mxu0 0
        %1228 = vmatpush1.bf16.msra.mxu0 0
        %1229 = vmatprep.subr.bf16.mxu0 0
        %1230 = vmatpush1.bf16.msra.mxu0 0
        %1231 = vmatprep.subr.bf16.mxu0 0
        %1232 = vmatpush1.bf16.msra.mxu0 0
        %1233 = vmatprep.subr.bf16.mxu0 0
        %1234 = vmatpush1.bf16.msra.mxu0 0
        %1235 = vmatprep.subr.bf16.mxu0 0
        %1236 = vmatpush1.bf16.msra.mxu0 0
        %1237 = vmatprep.subr.bf16.mxu0 0
        %1238 = vmatpush1.bf16.msra.mxu0 0
        %1239 = vmatprep.subr.bf16.mxu0 0
        %1240 = vmatpush1.bf16.msra.mxu0 0
        %1241 = vmatprep.subr.bf16.mxu0 0
        %1242 = vmatpush1.bf16.msra.mxu0 0
        %1243 = vmatprep.subr.bf16.mxu0 0
        %1244 = vmatpush1.bf16.msra.mxu0 0
        %1245 = vmatprep.subr.bf16.mxu0 0
        %1246 = vmatpush1.bf16.msra.mxu0 0
        %1247 = vmatprep.mubr.bf16.mxu0 0
        %1248 = vmatmul.mubr.bf16.gmra.mrb[0].mxu0 %v532
        %v1249 = vpop.f32.mrb[0].mxu0
        %v1250 = vadd.f32 0.0, %v1249
        %v1251 = vpop.f32.mrb[0].mxu0
        %v1252 = vpop.f32.mrb[0].mxu0
        %v1253 = vpop.f32.mrb[0].mxu0
        %1254 = vdwg.mxu0
        %v1255 = vpack.c.bf16 %v1136, %v1136
        %v1256 = vpack.c.bf16 %v1193, %v1193
        %v1258 = vsel %vm688, %v1255, 0
        %v1261 = vsel %vm688, %v1256, 0
        %1263 = vmatprep.subr.bf16.mxu0 0
        %1264 = vmatpush1.bf16.xpose.msra.mxu0 %v1261
        %1265 = vmatprep.subr.bf16.mxu0 0
        %1266 = vmatpush1.bf16.xpose.msra.mxu0 0
        %1267 = vmatprep.subr.bf16.mxu0 0
        %1268 = vmatpush1.bf16.xpose.msra.mxu0 0
        %1269 = vmatprep.subr.bf16.mxu0 0
        %1270 = vmatpush1.bf16.xpose.msra.mxu0 0
        %1271 = vmatprep.subr.bf16.mxu0 0
        %1272 = vmatpush1.bf16.xpose.msra.mxu0 0
        %1273 = vmatprep.subr.bf16.mxu0 0
        %1274 = vmatpush1.bf16.xpose.msra.mxu0 0
        %1275 = vmatprep.subr.bf16.mxu0 0
        %1276 = vmatpush1.bf16.xpose.msra.mxu0 0
        %1277 = vmatprep.subr.bf16.mxu0 0
        %1278 = vmatpush1.bf16.xpose.msra.mxu0 0
        %1279 = vmatprep.subr.bf16.mxu0 0
        %1280 = vmatpush1.bf16.xpose.msra.mxu0 0
        %1281 = vmatprep.subr.bf16.mxu0 0
        %1282 = vmatpush1.bf16.xpose.msra.mxu0 0
        %1283 = vmatprep.subr.bf16.mxu0 0
        %1284 = vmatpush1.bf16.xpose.msra.mxu0 0
        %1285 = vmatprep.subr.bf16.mxu0 0
        %1286 = vmatpush1.bf16.xpose.msra.mxu0 0
        %1287 = vmatprep.subr.bf16.mxu0 0
        %1288 = vmatpush1.bf16.xpose.msra.mxu0 0
        %1289 = vmatprep.subr.bf16.mxu0 0
        %1290 = vmatpush1.bf16.xpose.msra.mxu0 0
        %1291 = vmatprep.subr.bf16.mxu0 0
        %1292 = vmatpush1.bf16.xpose.msra.mxu0 0
        %1293 = vmatprep.subr.bf16.mxu0 0
        %1294 = vmatpush1.bf16.xpose.msra.mxu0 0
        %1295 = vmatprep.mubr.bf16.mxu0 0
        %1296 = vmatmul.mubr.bf16.gmra.mrb[0].mxu0 %v1258
        %v1297 = vpop.f32.mrb[0].mxu0
        %v1298 = vadd.f32 0.0, %v1297
        %v1299 = vpop.f32.mrb[0].mxu0
        %v1300 = vpop.f32.mrb[0].mxu0
        %v1301 = vpop.f32.mrb[0].mxu0
        %1302 = vdwg.mxu0
        %v1303 = vmul.f32 %v1298, 0.35355338
        %v1304 = vadd.f32 %v1303, %v511
        %v1305 = vsel %vm688, %v1304, -inf
        %1306 = vmax.xlane.f32.xlu0 %v1305
        %v1307 = vpop.xlane.xlu0 %1306
        %v1308 = vsub.f32 %v1304, %v1307
        %v1309 = vmul.f32 %v1308, 1.442695
        %v1310 = vpow.pop %v1309
        %v1311 = vsel %vm688, %v1310, 0.0
        %1312 = vadd.xlane.f32.xlu0 %v1311
        %v1313 = vpop.xlane.xlu0 %1312
        %v1314 = vrcp.pop %v1313
        %v1315 = vmul.f32 %v1310, %v1314
        %v1316 = vpack.c.bf16 %v1315, %v1315
        %v1317 = vpack.c.bf16 %v1250, %v1250
        %v1319 = vsel %vm688, %v1316, 0
        %v1322 = vsel %vm753, %v1317, 0
        %1324 = vmatprep.subr.bf16.mxu0 0
        %1325 = vmatpush1.bf16.msra.mxu0 %v1322
        %1326 = vmatprep.subr.bf16.mxu0 0
        %1327 = vmatpush1.bf16.msra.mxu0 0
        %1328 = vmatprep.subr.bf16.mxu0 0
        %1329 = vmatpush1.bf16.msra.mxu0 0
        %1330 = vmatprep.subr.bf16.mxu0 0
        %1331 = vmatpush1.bf16.msra.mxu0 0
        %1332 = vmatprep.subr.bf16.mxu0 0
        %1333 = vmatpush1.bf16.msra.mxu0 0
        %1334 = vmatprep.subr.bf16.mxu0 0
        %1335 = vmatpush1.bf16.msra.mxu0 0
        %1336 = vmatprep.subr.bf16.mxu0 0
        %1337 = vmatpush1.bf16.msra.mxu0 0
        %1338 = vmatprep.subr.bf16.mxu0 0
        %1339 = vmatpush1.bf16.msra.mxu0 0
        %1340 = vmatprep.subr.bf16.mxu0 0
        %1341 = vmatpush1.bf16.msra.mxu0 0
        %1342 = vmatprep.subr.bf16.mxu0 0
        %1343 = vmatpush1.bf16.msra.mxu0 0
        %1344 = vmatprep.subr.bf16.mxu0 0
        %1345 = vmatpush1.bf16.msra.mxu0 0
        %1346 = vmatprep.subr.bf16.mxu0 0
        %1347 = vmatpush1.bf16.msra.mxu0 0
        %1348 = vmatprep.subr.bf16.mxu0 0
        %1349 = vmatpush1.bf16.msra.mxu0 0
        %1350 = vmatprep.subr.bf16.mxu0 0
        %1351 = vmatpush1.bf16.msra.mxu0 0
        %1352 = vmatprep.subr.bf16.mxu0 0
        %1353 = vmatpush1.bf16.msra.mxu0 0
        %1354 = vmatprep.subr.bf16.mxu0 0
        %1355 = vmatpush1.bf16.msra.mxu0 0
        %1356 = vmatprep.mubr.bf16.mxu0 0
        %1357 = vmatmul.mubr.bf16.gmra.mrb[0].mxu0 %v1319
        %v1358 = vpop.f32.mrb[0].mxu0
        %v1359 = vadd.f32 0.0, %v1358
        %v1360 = vpop.f32.mrb[0].mxu0
        %v1361 = vpop.f32.mrb[0].mxu0
        %v1362 = vpop.f32.mrb[0].mxu0
        %1363 = vdwg.mxu0
        %1365 = vrot.lane.b32.xlu0 %v1359, 16
        %v1366 = vpop.permute.xlu0 %1365
        %vm1368 = vcmask 195712
        %1369 = vst.msk [vmem:[#allocation2] sm:$0xff] %vm1368, %v1366
        %s1370 = scalar_lea.vmem %s2, 48
        %v1371 = vld [vmem:[%s1370] sm:$0xf]
        %v1372 = vld [vmem:[%s1370 + $0x4] sm:$0xf]
        %v1373 = vld [vmem:[%s1370 + $0x8] sm:$0xf]
        %v1374 = vld [vmem:[%s1370 + $0xc] sm:$0xf]
        %v1379 = vunpack.c.l.b16 %v1371
        %v1380 = vunpack.c.l.b16 %v1372
        %v1381 = vunpack.c.l.b16 %v1373
        %v1382 = vunpack.c.l.b16 %v1374
        %v1383 = vpack.c.b16 %v1380, %v1379
        %v1384 = vpack.c.b16 %v1382, %v1381
        %1387 = vmatprep.subr.bf16.mxu0 0
        %1388 = vmatpush1.bf16.msra.mxu0 %v1383
        %1389 = vmatprep.subr.bf16.mxu0 0
        %1390 = vmatpush1.bf16.msra.mxu0 %v1384
        %1391 = vmatprep.subr.bf16.mxu0 0
        %1392 = vmatpush1.bf16.msra.mxu0 0
        %1393 = vmatprep.subr.bf16.mxu0 0
        %1394 = vmatpush1.bf16.msra.mxu0 0
        %1395 = vmatprep.subr.bf16.mxu0 0
        %1396 = vmatpush1.bf16.msra.mxu0 0
        %1397 = vmatprep.subr.bf16.mxu0 0
        %1398 = vmatpush1.bf16.msra.mxu0 0
        %1399 = vmatprep.subr.bf16.mxu0 0
        %1400 = vmatpush1.bf16.msra.mxu0 0
        %1401 = vmatprep.subr.bf16.mxu0 0
        %1402 = vmatpush1.bf16.msra.mxu0 0
        %1403 = vmatprep.subr.bf16.mxu0 0
        %1404 = vmatpush1.bf16.msra.mxu0 0
        %1405 = vmatprep.subr.bf16.mxu0 0
        %1406 = vmatpush1.bf16.msra.mxu0 0
        %1407 = vmatprep.subr.bf16.mxu0 0
        %1408 = vmatpush1.bf16.msra.mxu0 0
        %1409 = vmatprep.subr.bf16.mxu0 0
        %1410 = vmatpush1.bf16.msra.mxu0 0
        %1411 = vmatprep.subr.bf16.mxu0 0
        %1412 = vmatpush1.bf16.msra.mxu0 0
        %1413 = vmatprep.subr.bf16.mxu0 0
        %1414 = vmatpush1.bf16.msra.mxu0 0
        %1415 = vmatprep.subr.bf16.mxu0 0
        %1416 = vmatpush1.bf16.msra.mxu0 0
        %1417 = vmatprep.subr.bf16.mxu0 0
        %1418 = vmatpush1.bf16.msra.mxu0 0
        %1419 = vmatprep.mubr.bf16.mxu0 0
        %1420 = vmatmul.mubr.bf16.gmra.mrb[0].mxu0 %v532
        %v1421 = vpop.f32.mrb[0].mxu0
        %v1422 = vadd.f32 0.0, %v1421
        %v1423 = vpop.f32.mrb[0].mxu0
        %v1424 = vpop.f32.mrb[0].mxu0
        %v1425 = vpop.f32.mrb[0].mxu0
        %1426 = vdwg.mxu0
        %s1427 = scalar_lea.vmem %s3, 48
        %v1428 = vld [vmem:[%s1427] sm:$0xf]
        %v1429 = vld [vmem:[%s1427 + $0x4] sm:$0xf]
        %v1430 = vld [vmem:[%s1427 + $0x8] sm:$0xf]
        %v1431 = vld [vmem:[%s1427 + $0xc] sm:$0xf]
        %v1436 = vunpack.c.l.b16 %v1428
        %v1437 = vunpack.c.l.b16 %v1429
        %v1438 = vunpack.c.l.b16 %v1430
        %v1439 = vunpack.c.l.b16 %v1431
        %v1440 = vpack.c.b16 %v1437, %v1436
        %v1441 = vpack.c.b16 %v1439, %v1438
        %1444 = vmatprep.subr.bf16.mxu0 0
        %1445 = vmatpush1.bf16.msra.mxu0 %v1440
        %1446 = vmatprep.subr.bf16.mxu0 0
        %1447 = vmatpush1.bf16.msra.mxu0 %v1441
        %1448 = vmatprep.subr.bf16.mxu0 0
        %1449 = vmatpush1.bf16.msra.mxu0 0
        %1450 = vmatprep.subr.bf16.mxu0 0
        %1451 = vmatpush1.bf16.msra.mxu0 0
        %1452 = vmatprep.subr.bf16.mxu0 0
        %1453 = vmatpush1.bf16.msra.mxu0 0
        %1454 = vmatprep.subr.bf16.mxu0 0
        %1455 = vmatpush1.bf16.msra.mxu0 0
        %1456 = vmatprep.subr.bf16.mxu0 0
        %1457 = vmatpush1.bf16.msra.mxu0 0
        %1458 = vmatprep.subr.bf16.mxu0 0
        %1459 = vmatpush1.bf16.msra.mxu0 0
        %1460 = vmatprep.subr.bf16.mxu0 0
        %1461 = vmatpush1.bf16.msra.mxu0 0
        %1462 = vmatprep.subr.bf16.mxu0 0
        %1463 = vmatpush1.bf16.msra.mxu0 0
        %1464 = vmatprep.subr.bf16.mxu0 0
        %1465 = vmatpush1.bf16.msra.mxu0 0
        %1466 = vmatprep.subr.bf16.mxu0 0
        %1467 = vmatpush1.bf16.msra.mxu0 0
        %1468 = vmatprep.subr.bf16.mxu0 0
        %1469 = vmatpush1.bf16.msra.mxu0 0
        %1470 = vmatprep.subr.bf16.mxu0 0
        %1471 = vmatpush1.bf16.msra.mxu0 0
        %1472 = vmatprep.subr.bf16.mxu0 0
        %1473 = vmatpush1.bf16.msra.mxu0 0
        %1474 = vmatprep.subr.bf16.mxu0 0
        %1475 = vmatpush1.bf16.msra.mxu0 0
        %1476 = vmatprep.mubr.bf16.mxu0 0
        %1477 = vmatmul.mubr.bf16.gmra.mrb[0].mxu0 %v532
        %v1478 = vpop.f32.mrb[0].mxu0
        %v1479 = vadd.f32 0.0, %v1478
        %v1480 = vpop.f32.mrb[0].mxu0
        %v1481 = vpop.f32.mrb[0].mxu0
        %v1482 = vpop.f32.mrb[0].mxu0
        %1483 = vdwg.mxu0
        %s1484 = scalar_lea.vmem %s4, 48
        %v1485 = vld [vmem:[%s1484] sm:$0xf]
        %v1486 = vld [vmem:[%s1484 + $0x4] sm:$0xf]
        %v1487 = vld [vmem:[%s1484 + $0x8] sm:$0xf]
        %v1488 = vld [vmem:[%s1484 + $0xc] sm:$0xf]
        %v1493 = vunpack.c.l.b16 %v1485
        %v1494 = vunpack.c.l.b16 %v1486
        %v1495 = vunpack.c.l.b16 %v1487
        %v1496 = vunpack.c.l.b16 %v1488
        %v1497 = vpack.c.b16 %v1494, %v1493
        %v1498 = vpack.c.b16 %v1496, %v1495
        %1501 = vmatprep.subr.bf16.mxu0 0
        %1502 = vmatpush1.bf16.msra.mxu0 %v1497
        %1503 = vmatprep.subr.bf16.mxu0 0
        %1504 = vmatpush1.bf16.msra.mxu0 %v1498
        %1505 = vmatprep.subr.bf16.mxu0 0
        %1506 = vmatpush1.bf16.msra.mxu0 0
        %1507 = vmatprep.subr.bf16.mxu0 0
        %1508 = vmatpush1.bf16.msra.mxu0 0
        %1509 = vmatprep.subr.bf16.mxu0 0
        %1510 = vmatpush1.bf16.msra.mxu0 0
        %1511 = vmatprep.subr.bf16.mxu0 0
        %1512 = vmatpush1.bf16.msra.mxu0 0
        %1513 = vmatprep.subr.bf16.mxu0 0
        %1514 = vmatpush1.bf16.msra.mxu0 0
        %1515 = vmatprep.subr.bf16.mxu0 0
        %1516 = vmatpush1.bf16.msra.mxu0 0
        %1517 = vmatprep.subr.bf16.mxu0 0
        %1518 = vmatpush1.bf16.msra.mxu0 0
        %1519 = vmatprep.subr.bf16.mxu0 0
        %1520 = vmatpush1.bf16.msra.mxu0 0
        %1521 = vmatprep.subr.bf16.mxu0 0
        %1522 = vmatpush1.bf16.msra.mxu0 0
        %1523 = vmatprep.subr.bf16.mxu0 0
        %1524 = vmatpush1.bf16.msra.mxu0 0
        %1525 = vmatprep.subr.bf16.mxu0 0
        %1526 = vmatpush1.bf16.msra.mxu0 0
        %1527 = vmatprep.subr.bf16.mxu0 0
        %1528 = vmatpush1.bf16.msra.mxu0 0
        %1529 = vmatprep.subr.bf16.mxu0 0
        %1530 = vmatpush1.bf16.msra.mxu0 0
        %1531 = vmatprep.subr.bf16.mxu0 0
        %1532 = vmatpush1.bf16.msra.mxu0 0
        %1533 = vmatprep.mubr.bf16.mxu0 0
        %1534 = vmatmul.mubr.bf16.gmra.mrb[0].mxu0 %v532
        %v1535 = vpop.f32.mrb[0].mxu0
        %v1536 = vadd.f32 0.0, %v1535
        %v1537 = vpop.f32.mrb[0].mxu0
        %v1538 = vpop.f32.mrb[0].mxu0
        %v1539 = vpop.f32.mrb[0].mxu0
        %1540 = vdwg.mxu0
        %v1541 = vpack.c.bf16 %v1422, %v1422
        %v1542 = vpack.c.bf16 %v1479, %v1479
        %v1544 = vsel %vm688, %v1541, 0
        %v1547 = vsel %vm688, %v1542, 0
        %1549 = vmatprep.subr.bf16.mxu0 0
        %1550 = vmatpush1.bf16.xpose.msra.mxu0 %v1547
        %1551 = vmatprep.subr.bf16.mxu0 0
        %1552 = vmatpush1.bf16.xpose.msra.mxu0 0
        %1553 = vmatprep.subr.bf16.mxu0 0
        %1554 = vmatpush1.bf16.xpose.msra.mxu0 0
        %1555 = vmatprep.subr.bf16.mxu0 0
        %1556 = vmatpush1.bf16.xpose.msra.mxu0 0
        %1557 = vmatprep.subr.bf16.mxu0 0
        %1558 = vmatpush1.bf16.xpose.msra.mxu0 0
        %1559 = vmatprep.subr.bf16.mxu0 0
        %1560 = vmatpush1.bf16.xpose.msra.mxu0 0
        %1561 = vmatprep.subr.bf16.mxu0 0
        %1562 = vmatpush1.bf16.xpose.msra.mxu0 0
        %1563 = vmatprep.subr.bf16.mxu0 0
        %1564 = vmatpush1.bf16.xpose.msra.mxu0 0
        %1565 = vmatprep.subr.bf16.mxu0 0
        %1566 = vmatpush1.bf16.xpose.msra.mxu0 0
        %1567 = vmatprep.subr.bf16.mxu0 0
        %1568 = vmatpush1.bf16.xpose.msra.mxu0 0
        %1569 = vmatprep.subr.bf16.mxu0 0
        %1570 = vmatpush1.bf16.xpose.msra.mxu0 0
        %1571 = vmatprep.subr.bf16.mxu0 0
        %1572 = vmatpush1.bf16.xpose.msra.mxu0 0
        %1573 = vmatprep.subr.bf16.mxu0 0
        %1574 = vmatpush1.bf16.xpose.msra.mxu0 0
        %1575 = vmatprep.subr.bf16.mxu0 0
        %1576 = vmatpush1.bf16.xpose.msra.mxu0 0
        %1577 = vmatprep.subr.bf16.mxu0 0
        %1578 = vmatpush1.bf16.xpose.msra.mxu0 0
        %1579 = vmatprep.subr.bf16.mxu0 0
        %1580 = vmatpush1.bf16.xpose.msra.mxu0 0
        %1581 = vmatprep.mubr.bf16.mxu0 0
        %1582 = vmatmul.mubr.bf16.gmra.mrb[0].mxu0 %v1544
        %v1583 = vpop.f32.mrb[0].mxu0
        %v1584 = vadd.f32 0.0, %v1583
        %v1585 = vpop.f32.mrb[0].mxu0
        %v1586 = vpop.f32.mrb[0].mxu0
        %v1587 = vpop.f32.mrb[0].mxu0
        %1588 = vdwg.mxu0
        %v1589 = vmul.f32 %v1584, 0.35355338
        %v1590 = vadd.f32 %v1589, %v511
        %v1591 = vsel %vm688, %v1590, -inf
        %1592 = vmax.xlane.f32.xlu0 %v1591
        %v1593 = vpop.xlane.xlu0 %1592
        %v1594 = vsub.f32 %v1590, %v1593
        %v1595 = vmul.f32 %v1594, 1.442695
        %v1596 = vpow.pop %v1595
        %v1597 = vsel %vm688, %v1596, 0.0
        %1598 = vadd.xlane.f32.xlu0 %v1597
        %v1599 = vpop.xlane.xlu0 %1598
        %v1600 = vrcp.pop %v1599
        %v1601 = vmul.f32 %v1596, %v1600
        %v1602 = vpack.c.bf16 %v1601, %v1601
        %v1603 = vpack.c.bf16 %v1536, %v1536
        %v1605 = vsel %vm688, %v1602, 0
        %v1608 = vsel %vm753, %v1603, 0
        %1610 = vmatprep.subr.bf16.mxu0 0
        %1611 = vmatpush1.bf16.msra.mxu0 %v1608
        %1612 = vmatprep.subr.bf16.mxu0 0
        %1613 = vmatpush1.bf16.msra.mxu0 0
        %1614 = vmatprep.subr.bf16.mxu0 0
        %1615 = vmatpush1.bf16.msra.mxu0 0
        %1616 = vmatprep.subr.bf16.mxu0 0
        %1617 = vmatpush1.bf16.msra.mxu0 0
        %1618 = vmatprep.subr.bf16.mxu0 0
        %1619 = vmatpush1.bf16.msra.mxu0 0
        %1620 = vmatprep.subr.bf16.mxu0 0
        %1621 = vmatpush1.bf16.msra.mxu0 0
        %1622 = vmatprep.subr.bf16.mxu0 0
        %1623 = vmatpush1.bf16.msra.mxu0 0
        %1624 = vmatprep.subr.bf16.mxu0 0
        %1625 = vmatpush1.bf16.msra.mxu0 0
        %1626 = vmatprep.subr.bf16.mxu0 0
        %1627 = vmatpush1.bf16.msra.mxu0 0
        %1628 = vmatprep.subr.bf16.mxu0 0
        %1629 = vmatpush1.bf16.msra.mxu0 0
        %1630 = vmatprep.subr.bf16.mxu0 0
        %1631 = vmatpush1.bf16.msra.mxu0 0
        %1632 = vmatprep.subr.bf16.mxu0 0
        %1633 = vmatpush1.bf16.msra.mxu0 0
        %1634 = vmatprep.subr.bf16.mxu0 0
        %1635 = vmatpush1.bf16.msra.mxu0 0
        %1636 = vmatprep.subr.bf16.mxu0 0
        %1637 = vmatpush1.bf16.msra.mxu0 0
        %1638 = vmatprep.subr.bf16.mxu0 0
        %1639 = vmatpush1.bf16.msra.mxu0 0
        %1640 = vmatprep.subr.bf16.mxu0 0
        %1641 = vmatpush1.bf16.msra.mxu0 0
        %1642 = vmatprep.mubr.bf16.mxu0 0
        %1643 = vmatmul.mubr.bf16.gmra.mrb[0].mxu0 %v1605
        %v1644 = vpop.f32.mrb[0].mxu0
        %v1645 = vadd.f32 0.0, %v1644
        %v1646 = vpop.f32.mrb[0].mxu0
        %v1647 = vpop.f32.mrb[0].mxu0
        %v1648 = vpop.f32.mrb[0].mxu0
        %1649 = vdwg.mxu0
        %1651 = vrot.lane.b32.xlu0 %v1645, 24
        %v1652 = vpop.permute.xlu0 %1651
        %vm1654 = vcmask 261312
        %1655 = vst.msk [vmem:[#allocation2] sm:$0xff] %vm1654, %v1652
        %v1656 = vld [vmem:[#allocation2] sm:$0xff]
        %v1657 = vpack.c.bf16 %v1656, %v1656
        %v1658 = vld [vmem:[%s5] sm:$0xf]
        %v1659 = vld [vmem:[%s5 + $0x4] sm:$0xf]
        %v1660 = vld [vmem:[%s5 + $0x8] sm:$0xf]
        %v1661 = vld [vmem:[%s5 + $0xc] sm:$0xf]
        %v1662 = vld [vmem:[%s6] sm:$0x1]
        %v1664 = vlaneseq
        %v1665 = vshrl.u32 %v1664, 7
        %v1666 = vsub.s32 0, %v1665
        %v1667 = vrot.slane %v1662, %v1666
        %v1673 = vunpack.c.l.b16 %v1658
        %v1674 = vunpack.c.l.b16 %v1659
        %v1675 = vunpack.c.l.b16 %v1660
        %v1676 = vunpack.c.l.b16 %v1661
        %v1677 = vpack.c.b16 %v1674, %v1673
        %v1678 = vpack.c.b16 %v1676, %v1675
        %v1682 = vsel %vm530, %v1657, 0
        %1684 = vmatprep.subr.bf16.mxu0 0
        %1685 = vmatpush1.bf16.msra.mxu0 %v1677
        %1686 = vmatprep.subr.bf16.mxu0 0
        %1687 = vmatpush1.bf16.msra.mxu0 %v1678
        %1688 = vmatprep.subr.bf16.mxu0 0
        %1689 = vmatpush1.bf16.msra.mxu0 0
        %1690 = vmatprep.subr.bf16.mxu0 0
        %1691 = vmatpush1.bf16.msra.mxu0 0
        %1692 = vmatprep.subr.bf16.mxu0 0
        %1693 = vmatpush1.bf16.msra.mxu0 0
        %1694 = vmatprep.subr.bf16.mxu0 0
        %1695 = vmatpush1.bf16.msra.mxu0 0
        %1696 = vmatprep.subr.bf16.mxu0 0
        %1697 = vmatpush1.bf16.msra.mxu0 0
        %1698 = vmatprep.subr.bf16.mxu0 0
        %1699 = vmatpush1.bf16.msra.mxu0 0
        %1700 = vmatprep.subr.bf16.mxu0 0
        %1701 = vmatpush1.bf16.msra.mxu0 0
        %1702 = vmatprep.subr.bf16.mxu0 0
        %1703 = vmatpush1.bf16.msra.mxu0 0
        %1704 = vmatprep.subr.bf16.mxu0 0
        %1705 = vmatpush1.bf16.msra.mxu0 0
        %1706 = vmatprep.subr.bf16.mxu0 0
        %1707 = vmatpush1.bf16.msra.mxu0 0
        %1708 = vmatprep.subr.bf16.mxu0 0
        %1709 = vmatpush1.bf16.msra.mxu0 0
        %1710 = vmatprep.subr.bf16.mxu0 0
        %1711 = vmatpush1.bf16.msra.mxu0 0
        %1712 = vmatprep.subr.bf16.mxu0 0
        %1713 = vmatpush1.bf16.msra.mxu0 0
        %1714 = vmatprep.subr.bf16.mxu0 0
        %1715 = vmatpush1.bf16.msra.mxu0 0
        %1716 = vmatprep.mubr.bf16.mxu0 0
        %1717 = vmatmul.mubr.bf16.gmra.mrb[0].mxu0 %v1682
        %v1718 = vpop.f32.mrb[0].mxu0
        %v1719 = vadd.f32 %v1667, %v1718
        %v1720 = vpop.f32.mrb[0].mxu0
        %v1721 = vpop.f32.mrb[0].mxu0
        %v1722 = vpop.f32.mrb[0].mxu0
        %1723 = vdwg.mxu0
        %v1724 = vadd.f32 %v1719, %v505
        %v1725 = vld [vmem:[%s7] sm:$0x1]
        %v1726 = vld [vmem:[%s8] sm:$0x1]
        %v1727 = vsel %vm530, %v1724, 0.0
        %1728 = vadd.xlane.f32.xlu0 %v1727
        %v1729 = vpop.xlane.xlu0 %1728
        %v1730 = vrcp.pop 32.0
        %v1731 = vmul.f32 %v1729, %v1730
        %v1732 = vsub.f32 %v1724, %v1731
        %v1733 = vmul.f32 %v1732, %v1732
        %v1734 = vsel %vm530, %v1733, 0.0
        %1735 = vadd.xlane.f32.xlu0 %v1734
        %v1736 = vpop.xlane.xlu0 %1735
        %v1737 = vrcp.pop 31.0
        %v1738 = vmul.f32 %v1736, %v1737
        %v1739 = vrsqrt.pop %v1738
        %v1740 = vmul.f32 %v1738, %v1739
        %vm1741 = vcmp.eq.f32.partialorder %v1738, inf
        %v1742 = vsel %vm1741, %v1738, %v1740
        %vm1743 = vcmp.eq.f32.partialorder %v1738, 0.0
        %v1744 = vand.u32 %v1738, 2147483648
        %v1745 = vsel %vm1743, %v1744, %v1742
        %v1746 = vadd.f32 %v1745, 0.001
        %v1747 = vrcp.pop %v1746
        %v1748 = vmul.f32 %v1732, %v1747
        %v1750 = vlaneseq
        %v1751 = vshrl.u32 %v1750, 7
        %v1752 = vsub.s32 0, %v1751
        %v1753 = vrot.slane %v1725, %v1752
        %v1755 = vmul.f32 %v1748, %v1753
        %v1757 = vlaneseq
        %v1758 = vshrl.u32 %v1757, 7
        %v1759 = vsub.s32 0, %v1758
        %v1760 = vrot.slane %v1726, %v1759
        %v1762 = vadd.f32 %v1755, %v1760
        %v1763 = vpack.c.bf16 %v1762, %v1762
        %v1764 = vld [vmem:[%s9] sm:$0xf]
        %v1765 = vld [vmem:[%s9 + $0x4] sm:$0xf]
        %v1766 = vld [vmem:[%s9 + $0x8] sm:$0xf]
        %v1767 = vld [vmem:[%s9 + $0xc] sm:$0xf]
        %v1768 = vld [vmem:[%s10] sm:$0x1]
        %v1770 = vlaneseq
        %v1771 = vshrl.u32 %v1770, 7
        %v1772 = vsub.s32 0, %v1771
        %v1773 = vrot.slane %v1768, %v1772
        %v1779 = vunpack.c.l.b16 %v1764
        %v1780 = vunpack.c.l.b16 %v1765
        %v1781 = vunpack.c.l.b16 %v1766
        %v1782 = vunpack.c.l.b16 %v1767
        %v1783 = vpack.c.b16 %v1780, %v1779
        %v1784 = vpack.c.b16 %v1782, %v1781
        %v1788 = vsel %vm530, %v1763, 0
        %1790 = vmatprep.subr.bf16.mxu0 0
        %1791 = vmatpush1.bf16.msra.mxu0 %v1783
        %1792 = vmatprep.subr.bf16.mxu0 0
        %1793 = vmatpush1.bf16.msra.mxu0 %v1784
        %1794 = vmatprep.subr.bf16.mxu0 0
        %1795 = vmatpush1.bf16.msra.mxu0 0
        %1796 = vmatprep.subr.bf16.mxu0 0
        %1797 = vmatpush1.bf16.msra.mxu0 0
        %1798 = vmatprep.subr.bf16.mxu0 0
        %1799 = vmatpush1.bf16.msra.mxu0 0
        %1800 = vmatprep.subr.bf16.mxu0 0
        %1801 = vmatpush1.bf16.msra.mxu0 0
        %1802 = vmatprep.subr.bf16.mxu0 0
        %1803 = vmatpush1.bf16.msra.mxu0 0
        %1804 = vmatprep.subr.bf16.mxu0 0
        %1805 = vmatpush1.bf16.msra.mxu0 0
        %1806 = vmatprep.subr.bf16.mxu0 0
        %1807 = vmatpush1.bf16.msra.mxu0 0
        %1808 = vmatprep.subr.bf16.mxu0 0
        %1809 = vmatpush1.bf16.msra.mxu0 0
        %1810 = vmatprep.subr.bf16.mxu0 0
        %1811 = vmatpush1.bf16.msra.mxu0 0
        %1812 = vmatprep.subr.bf16.mxu0 0
        %1813 = vmatpush1.bf16.msra.mxu0 0
        %1814 = vmatprep.subr.bf16.mxu0 0
        %1815 = vmatpush1.bf16.msra.mxu0 0
        %1816 = vmatprep.subr.bf16.mxu0 0
        %1817 = vmatpush1.bf16.msra.mxu0 0
        %1818 = vmatprep.subr.bf16.mxu0 0
        %1819 = vmatpush1.bf16.msra.mxu0 0
        %1820 = vmatprep.subr.bf16.mxu0 0
        %1821 = vmatpush1.bf16.msra.mxu0 0
        %1822 = vmatprep.mubr.bf16.mxu0 0
        %1823 = vmatmul.mubr.bf16.gmra.mrb[0].mxu0 %v1788
        %v1824 = vpop.f32.mrb[0].mxu0
        %v1825 = vadd.f32 %v1773, %v1824
        %v1826 = vpop.f32.mrb[0].mxu0
        %v1827 = vpop.f32.mrb[0].mxu0
        %v1828 = vpop.f32.mrb[0].mxu0
        %1829 = vdwg.mxu0
        %v1830 = vmax.f32 %v1825, 0.0
        %v1831 = vpack.c.bf16 %v1830, %v1830
        %v1832 = vld [vmem:[%s11] sm:$0xf]
        %v1833 = vld [vmem:[%s11 + $0x4] sm:$0xf]
        %v1834 = vld [vmem:[%s11 + $0x8] sm:$0xf]
        %v1835 = vld [vmem:[%s11 + $0xc] sm:$0xf]
        %v1836 = vld [vmem:[%s11 + $0x10] sm:$0xf]
        %v1837 = vld [vmem:[%s11 + $0x14] sm:$0xf]
        %v1838 = vld [vmem:[%s11 + $0x18] sm:$0xf]
        %v1839 = vld [vmem:[%s11 + $0x1c] sm:$0xf]
        %v1840 = vld [vmem:[%s12] sm:$0x1]
        %v1842 = vlaneseq
        %v1843 = vshrl.u32 %v1842, 7
        %v1844 = vsub.s32 0, %v1843
        %v1845 = vrot.slane %v1840, %v1844
        %v1855 = vunpack.c.l.b16 %v1832
        %v1856 = vunpack.c.l.b16 %v1833
        %v1857 = vunpack.c.l.b16 %v1834
        %v1858 = vunpack.c.l.b16 %v1835
        %v1859 = vunpack.c.l.b16 %v1836
        %v1860 = vunpack.c.l.b16 %v1837
        %v1861 = vunpack.c.l.b16 %v1838
        %v1862 = vunpack.c.l.b16 %v1839
        %v1863 = vpack.c.b16 %v1856, %v1855
        %v1864 = vpack.c.b16 %v1858, %v1857
        %v1865 = vpack.c.b16 %v1860, %v1859
        %v1866 = vpack.c.b16 %v1862, %v1861
        %vm1871 = vcmask 523264
        %v1873 = vsel %vm1871, %v1831, 0
        %1875 = vmatprep.subr.bf16.mxu0 0
        %1876 = vmatpush1.bf16.msra.mxu0 %v1863
        %1877 = vmatprep.subr.bf16.mxu0 0
        %1878 = vmatpush1.bf16.msra.mxu0 %v1864
        %1879 = vmatprep.subr.bf16.mxu0 0
        %1880 = vmatpush1.bf16.msra.mxu0 %v1865
        %1881 = vmatprep.subr.bf16.mxu0 0
        %1882 = vmatpush1.bf16.msra.mxu0 %v1866
        %1883 = vmatprep.subr.bf16.mxu0 0
        %1884 = vmatpush1.bf16.msra.mxu0 0
        %1885 = vmatprep.subr.bf16.mxu0 0
        %1886 = vmatpush1.bf16.msra.mxu0 0
        %1887 = vmatprep.subr.bf16.mxu0 0
        %1888 = vmatpush1.bf16.msra.mxu0 0
        %1889 = vmatprep.subr.bf16.mxu0 0
        %1890 = vmatpush1.bf16.msra.mxu0 0
        %1891 = vmatprep.subr.bf16.mxu0 0
        %1892 = vmatpush1.bf16.msra.mxu0 0
        %1893 = vmatprep.subr.bf16.mxu0 0
        %1894 = vmatpush1.bf16.msra.mxu0 0
        %1895 = vmatprep.subr.bf16.mxu0 0
        %1896 = vmatpush1.bf16.msra.mxu0 0
        %1897 = vmatprep.subr.bf16.mxu0 0
        %1898 = vmatpush1.bf16.msra.mxu0 0
        %1899 = vmatprep.subr.bf16.mxu0 0
        %1900 = vmatpush1.bf16.msra.mxu0 0
        %1901 = vmatprep.subr.bf16.mxu0 0
        %1902 = vmatpush1.bf16.msra.mxu0 0
        %1903 = vmatprep.subr.bf16.mxu0 0
        %1904 = vmatpush1.bf16.msra.mxu0 0
        %1905 = vmatprep.subr.bf16.mxu0 0
        %1906 = vmatpush1.bf16.msra.mxu0 0
        %1907 = vmatprep.mubr.bf16.mxu0 0
        %1908 = vmatmul.mubr.bf16.gmra.mrb[0].mxu0 %v1873
        %v1909 = vpop.f32.mrb[0].mxu0
        %v1910 = vadd.f32 %v1845, %v1909
        %v1911 = vpop.f32.mrb[0].mxu0
        %v1912 = vpop.f32.mrb[0].mxu0
        %v1913 = vpop.f32.mrb[0].mxu0
        %1914 = vdwg.mxu0
        %v1915 = vadd.f32 %v1910, %v1762
        %v1916 = vld [vmem:[%s13] sm:$0x1]
        %v1917 = vld [vmem:[%s14] sm:$0x1]
        %v1918 = vsel %vm530, %v1915, 0.0
        %1919 = vadd.xlane.f32.xlu0 %v1918
        %v1920 = vpop.xlane.xlu0 %1919
        %v1921 = vmul.f32 %v1920, %v1730
        %v1922 = vsub.f32 %v1915, %v1921
        %v1923 = vmul.f32 %v1922, %v1922
        %v1924 = vsel %vm530, %v1923, 0.0
        %1925 = vadd.xlane.f32.xlu0 %v1924
        %v1926 = vpop.xlane.xlu0 %1925
        %v1927 = vmul.f32 %v1926, %v1737
        %v1928 = vrsqrt.pop %v1927
        %v1929 = vmul.f32 %v1927, %v1928
        %vm1930 = vcmp.eq.f32.partialorder %v1927, inf
        %v1931 = vsel %vm1930, %v1927, %v1929
        %vm1932 = vcmp.eq.f32.partialorder %v1927, 0.0
        %v1933 = vand.u32 %v1927, 2147483648
        %v1934 = vsel %vm1932, %v1933, %v1931
        %v1935 = vadd.f32 %v1934, 0.001
        %v1936 = vrcp.pop %v1935
        %v1937 = vmul.f32 %v1922, %v1936
        %v1939 = vlaneseq
        %v1940 = vshrl.u32 %v1939, 7
        %v1941 = vsub.s32 0, %v1940
        %v1942 = vrot.slane %v1916, %v1941
        %v1944 = vmul.f32 %v1937, %v1942
        %v1946 = vlaneseq
        %v1947 = vshrl.u32 %v1946, 7
        %v1948 = vsub.s32 0, %v1947
        %v1949 = vrot.slane %v1917, %v1948
        %v1951 = vadd.f32 %v1944, %v1949
        %1952 = vst.msk [vmem:[%s496] sm:$0xff] %vm530, %v1951
        %s1953 = sand.u32 %s362, 1
        %s1954 = scalar_lea.sflag [#allocation4], %s1953
        %s1955 = sand.u32 %s362, 1
        %s1956 = smul.addr %s1955, 8
        %s1957 = scalar_lea.vmem [#allocation3], %s1956
        // Predicated region
        $region81: #{tpu_custom_call.1} parent=79 // pred_check
          %p1958 = pneg %p372
        $region82: #{tpu_custom_call.1} parent=79 // pred_check_branch
          %1960 = sbr.rel (%p1958) target = $region84
        $region83: #{tpu_custom_call.1} parent=79 // pred_region
          %s1962 = ssub.s32 128, 128
          %1963 = vsyncadd %s1954, %s1962
          %s1964 = smul.addr %s29, 128
          %s1965 = scalar_lea.hbm %s15, %s1964
          %s1967 = sshll.u32 %s1957, 4
          %s1968 = int_to_ptr.vmem [resolvable:$true] %s1967
          %1970 = dma.vmem_to_hbm [thread:$0]  %s1968, 128, %s1965, %s1954
        $region84: #{tpu_custom_call.1} parent=79 // pred_fallthru
          _
      $region80: #{tpu_custom_call.1} parent=5 // pred_fallthru
        _
      %p1971 = scmp.le.s32.totalorder 2, %s24
      // Predicated region
      $region85: #{tpu_custom_call.1} parent=5 // pred_check
        %p1972 = pneg %p1971
      $region86: #{tpu_custom_call.1} parent=5 // pred_check_branch
        %1974 = sbr.rel (%p1972) target = $region88
      $region87: #{tpu_custom_call.1} parent=5 // pred_region
        %s1975 = ssub.s32 %s24, 2
        // Predicated region
        $region89: #{tpu_custom_call.1} parent=87 // pred_check
          %p1976 = pneg %p378
        $region90: #{tpu_custom_call.1} parent=87 // pred_check_branch
          %1978 = sbr.rel (%p1976) target = $region92
        $region91: #{tpu_custom_call.1} parent=87 // pred_region
          %s1979 = sand.u32 %s363, 1
          %s1980 = scalar_lea.sflag [#allocation4], %s1979
          %s1981 = sand.u32 %s363, 1
          %s1982 = smul.addr %s1981, 8
          %s1983 = scalar_lea.vmem [#allocation3], %s1982
          %1984 = dma.done %s1980, 128
        $region92: #{tpu_custom_call.1} parent=87 // pred_fallthru
          _
      $region88: #{tpu_custom_call.1} parent=5 // pred_fallthru
        _
    $region6: #{tpu_custom_call.1} parent=1 // loop_footer
      %s28 = sadd.s32 1, %s24
    $region7: #{tpu_custom_call.1} parent=1 // loop_footer_branch
      %23 = sbr.rel target = $region3
    $region8: #{tpu_custom_call.1} parent=1 // loop_exit
      _
    %1985 = vsyncpa [#allocation4], 1
    %s1986 = scalar_lea.sflag [#allocation4], 1
    %1987 = vsyncpa %s1986, 1

</llo_original>
